<compile_context>
chip_gen: v5e
topology: v5e:2x2
jax: 0.10.0
libtpu: 0.0.40
codegen_flags: <defaults>
</compile_context>

<pallas_src>
import numpy as np
import jax
import jax.numpy as jnp
from jax.experimental import pallas as pl
from jax.experimental.pallas import tpu as pltpu

NEG_SLOPE = 0.01  # F.leaky_relu default negative_slope


# ---------------------------------------------------------------------------
# Kernel
# ---------------------------------------------------------------------------
def _make_kernel(num_layers, S, Bt, offs, widths, use_roll):
    L = num_layers
    M = Bt * S

    def kernel(x_ref, *refs):
        w_refs = refs[:L + 1]          # fused conv weights + fused linear weight
        bias_ref = refs[L + 1]         # (1, padded_total) f32
        out_ref = refs[L + 2]          # (Bt, S, 2) f32

        # Position of each row inside its own sequence (conv halo masking when
        # several batch elements are folded into the matmul M dimension).
        row = jax.lax.broadcasted_iota(jnp.int32, (M, 1), 0)
        s_in = row % S
        valid = {d: (s_in >= -d) if d < 0 else (s_in < S - d)
                 for d in (-2, -1, 1, 2)}

        def window(h):
            # (M, C) bf16 -> (M, 5*C) bf16; tap k holds h shifted so row r sees
            # h[r + k - 2], zeros outside each sequence.
            cols = []
            for k in range(5):
                d = k - 2
                if d == 0:
                    cols.append(h)
                    continue
                if use_roll:
                    # XLU rotate; the wrapped rows are exactly the rows the
                    # validity mask zeroes, so this matches zero-padded conv.
                    sh = pltpu.roll(h, shift=(-d) % M, axis=0)
                else:
                    zeros = jnp.zeros((abs(d), h.shape[1]), h.dtype)
                    if d < 0:
                        sh = jnp.concatenate([zeros, h[: M + d]], axis=0)
                    else:
                        sh = jnp.concatenate([h[d:], zeros], axis=0)
                cols.append(jnp.where(valid[d], sh, jnp.zeros_like(sh)))
            return jnp.concatenate(cols, axis=1)

        # (Bt, S, D) bf16 -> (M, D) bf16, layout-preserving collapse.
        h = x_ref[...].reshape(M, x_ref.shape[-1])

        # TODO(synk): nn.Dropout(0.15) is treated as inference-mode identity.

        # Fused conv stack: both branches run side by side (layer-0 weights
        # concatenated on cout, later layers block-diagonal); the 5 conv taps
        # are folded into a single matmul per layer (K = 5*Cin_fused).
        for l in range(L):
            acc = jnp.dot(window(h), w_refs[l][...],
                          preferred_element_type=jnp.float32)
            acc = acc + bias_ref[:, offs[l]:offs[l] + widths[l]]
            act = jnp.where(acc >= 0.0, acc, NEG_SLOPE * acc)   # leaky_relu
            h = act.astype(jnp.bfloat16)

        # Fused final projection -> (M, 2): col 0 = start logits, col 1 = end.
        logits = jnp.dot(h, w_refs[L][...], preferred_element_type=jnp.float32)
        logits = logits + bias_ref[:, offs[L]:offs[L] + widths[L]]
        out_ref[...] = logits.reshape(Bt, S, 2)

    return kernel


# ---------------------------------------------------------------------------
# Wrapper-side parameter packing
# ---------------------------------------------------------------------------
def _pack_fused_params(params, chans, num_layers):
    """Repack per-branch conv/linear weights into fused bf16 matrices and a
    single lane-aligned f32 bias row."""
    L = num_layers
    ws = []

    # Layer 0: shared input (the layer mean) -> concat the two branches on cout.
    w1 = params["b1"]["conv_w"][0]                     # (5, c0, c1)
    w2 = params["b2"]["conv_w"][0]
    w0 = jnp.concatenate([w1, w2], axis=2)             # (5, c0, 2*c1)
    ws.append(w0.reshape(5 * chans[0], 2 * chans[1]).astype(jnp.bfloat16))

    # Layers 1..L-1: block-diagonal per tap so one matmul runs both branches.
    for l in range(1, L):
        cin = chans[l]
        w1 = params["b1"]["conv_w"][l]                 # (5, cin, cout)
        w2 = params["b2"]["conv_w"][l]
        top = jnp.concatenate([w1, jnp.zeros_like(w1)], axis=2)   # branch-1 rows
        bot = jnp.concatenate([jnp.zeros_like(w2), w2], axis=2)   # branch-2 rows
        wl = jnp.concatenate([top, bot], axis=1)       # (5, 2*cin, 2*cout)
        ws.append(wl.reshape(5 * 2 * cin, 2 * chans[l + 1]).astype(jnp.bfloat16))

    # Final linear: block-diagonal (2*cf, 2).
    cf = chans[-1]
    lw1 = params["b1"]["lin_w"]                        # (cf, 1)
    lw2 = params["b2"]["lin_w"]
    z = jnp.zeros((cf, 1), jnp.float32)
    w_lin = jnp.concatenate([jnp.concatenate([lw1, z], axis=1),
                             jnp.concatenate([z, lw2], axis=1)], axis=0)
    ws.append(w_lin.astype(jnp.bfloat16))              # (2*cf, 2)

    # Biases packed into one f32 row, each segment padded to a 128-lane start.
    segs = []
    for l in range(L):
        segs.append(jnp.concatenate([params["b1"]["conv_b"][l],
                                     params["b2"]["conv_b"][l]], axis=1))
    segs.append(jnp.concatenate([params["b1"]["lin_b"],
                                 params["b2"]["lin_b"]], axis=1))
    offs, widths, padded = [], [], []
    cur = 0
    for s in segs:
        w = s.shape[1]
        pad = (-w) % 128
        padded.append(jnp.pad(s, ((0, 0), (0, pad))) if pad else s)
        offs.append(cur)
        widths.append(w)
        cur += w + pad
    bias_packed = jnp.concatenate(padded, axis=1).astype(jnp.float32)
    return ws, bias_packed, offs, widths


def _vmem_capacity_bytes():
    try:
        return int(pltpu.get_tpu_info().vmem_capacity_bytes)
    except Exception:
        return 128 * 1024 * 1024


def _pick_batch_tile(B, S, vmem_cap):
    # Fold batch elements into the matmul M dimension when S is small so one
    # grid step amortizes the ~0.35us step overhead.  Cap M lower on 64 MiB
    # parts (v7x) and always keep >=2 grid steps so the "parallel" batch axis
    # can be split across TensorCores.
    row_cap = 512 if vmem_cap <= (96 << 20) else 1024
    cap = max(1, row_cap // max(S, 1))
    if B >= 2:
        cap = min(cap, max(1, B // 2))
    bt = 1
    for d in range(1, B + 1):
        if B % d == 0 and d <= cap:
            bt = d
    return bt


def _const_spec(shape, single_buffer):
    index_map = lambda i: (0, 0)
    if single_buffer:
        return pl.BlockSpec(shape, index_map,
                            pipeline_mode=pl.Buffered(buffer_count=1))
    return pl.BlockSpec(shape, index_map)


# ---------------------------------------------------------------------------
# Public forward
# ---------------------------------------------------------------------------
def stack_cnn_head(x_stack, params, *, layers_used, num_layers, d_model,
                   variant="fast"):
    """x_stack: (L, B, S, d_model) stacked encoder-layer outputs.

    variant: "fast" (roll shifts, single-buffered weights, input fusion) or
             "safe" (concat shifts, default pipelining).
    """
    L_stack, B, S, D = x_stack.shape
    assert D == d_model
    chans = [d_model // (2 ** l) for l in range(num_layers + 1)]
    fast = variant == "fast"

    # Layer mean is a memory-bound reduction -> XLA; kernel reads one bf16
    # (B, S, D) tensor (allow_input_fusion can pull it into the call when jitted).
    mean = jnp.mean(x_stack[L_stack - layers_used:], axis=0)
    mean_bf16 = mean.astype(jnp.bfloat16)

    ws, bias_packed, offs, widths = _pack_fused_params(params, chans, num_layers)

    vmem_cap = _vmem_capacity_bytes()
    Bt = _pick_batch_tile(B, S, vmem_cap)
    grid = (B // Bt,)

    in_specs = [pl.BlockSpec((Bt, S, D), lambda i: (i, 0, 0))]
    for w in ws:
        in_specs.append(_const_spec(w.shape, fast))
    in_specs.append(_const_spec(bias_packed.shape, fast))

    out_spec = pl.BlockSpec((Bt, S, 2), lambda i: (i, 0, 0))
    out_shape = jax.ShapeDtypeStruct((B, S, 2), jnp.float32)

    # Generation-aware VMEM budget: weights (x1 if single-buffered, x2 default)
    # + double-buffered I/O blocks + window slab / temporaries + headroom.
    weight_bufs = 1 if fast else 2
    w_bytes = sum(int(np.prod(w.shape)) * 2 for w in ws) + bias_packed.size * 4
    in_blk = Bt * S * D * 2
    out_blk = Bt * S * 2 * 4
    slab = Bt * S * 5 * chans[0] * 2
    need = weight_bufs * w_bytes + 2 * (in_blk + out_blk) + 4 * slab + (8 << 20)
    vmem_limit = int(max(16 << 20,
                         min(max(32 << 20, need), vmem_cap - (12 << 20))))

    cp_kwargs = dict(dimension_semantics=("parallel",),
                     vmem_limit_bytes=vmem_limit)
    if fast:
        cp_kwargs["allow_input_fusion"] = [0]

    kernel = _make_kernel(num_layers, S, Bt, offs, widths, use_roll=fast)
    out = pl.pallas_call(
        kernel,
        out_shape=out_shape,
        grid_spec=pltpu.PrefetchScalarGridSpec(
            num_scalar_prefetch=0,
            grid=grid,
            in_specs=in_specs,
            out_specs=out_spec,
        ),
        compiler_params=pltpu.CompilerParams(**cp_kwargs),
    )(mean_bf16, *ws, bias_packed)

    return {"start_logits": out[..., 0], "end_logits": out[..., 1]}


# ---------------------------------------------------------------------------
# Deterministic init + pure-JAX reference (eval-mode PyTorch mirror)
# ---------------------------------------------------------------------------
def init_params(key, d_model, num_layers):
    chans = [d_model // (2 ** l) for l in range(num_layers + 1)]
    params = {}
    for branch in ("b1", "b2"):
        conv_w, conv_b = [], []
        for l in range(num_layers):
            cin, cout = chans[l], chans[l + 1]
            key, k1, k2 = jax.random.split(key, 3)
            fan_in, fan_out = cin * 5, cout * 5
            bound = float(np.sqrt(6.0 / (fan_in + fan_out)))
            w = jax.random.uniform(k1, (cout, cin, 5), jnp.float32, -bound, bound)
            conv_w.append(jnp.transpose(w, (2, 1, 0)))          # (5, cin, cout)
            bb = float(1.0 / np.sqrt(fan_in))
            conv_b.append(jax.random.uniform(k2, (1, cout), jnp.float32, -bb, bb))
        key, k1, k2 = jax.random.split(key, 3)
        cf = chans[-1]
        bound = float(np.sqrt(6.0 / (cf + 1)))
        lw = jax.random.uniform(k1, (1, cf), jnp.float32, -bound, bound)
        lbb = float(1.0 / np.sqrt(cf))
        lb = jax.random.uniform(k2, (1,), jnp.float32, -lbb, lbb)
        params[branch] = {"conv_w": conv_w, "conv_b": conv_b,
                          "lin_w": jnp.transpose(lw), "lin_b": lb.reshape(1, 1)}
    return params


def ref_forward(x_stack, params, *, layers_used):
    sel = jnp.stack([x_stack[-i - 1] for i in range(layers_used)])
    out = jnp.mean(sel, axis=0)                                  # (B, S, D)

    def run_branch(p):
        h = out
        for w, b in zip(p["conv_w"], p["conv_b"]):               # w: (5, cin, cout)
            B_, S_, _ = h.shape
            hp = jnp.pad(h, ((0, 0), (2, 2), (0, 0)))
            conv = sum(jnp.einsum("bsc,cd->bsd", hp[:, k:k + S_, :], w[k])
                       for k in range(5)) + b[None, :, :]
            h = jnp.where(conv >= 0, conv, NEG_SLOPE * conv)
        logits = jnp.einsum("bsc,cd->bsd", h, p["lin_w"]) + p["lin_b"][None]
        return logits[..., 0]

    return run_branch(params["b1"]), run_branch(params["b2"])


if __name__ == "__main__":
    d_model, num_layers, layers_used = 32, 4, 2
    B, S, L = 2, 16, 3

    key = jax.random.PRNGKey(0)
    key, kx = jax.random.split(key)
    # x_stack is the stack of encoder-layer outputs the PyTorch module indexes.
    x_stack = jax.random.normal(kx, (L, B, S, d_model), jnp.float32)
    params = init_params(key, d_model, num_layers)

    ref_s, ref_e = ref_forward(x_stack, params, layers_used=layers_used)

    def run_and_check(variant):
        out = stack_cnn_head(x_stack, params, layers_used=layers_used,
                             num_layers=num_layers, d_model=d_model,
                             variant=variant)
        jax.block_until_ready(out)
        # bf16 matmul operands + bf16 activations (f32 accumulate) -> bf16-level
        # tolerance against the f32 reference.
        np.testing.assert_allclose(np.asarray(out["start_logits"]),
                                   np.asarray(ref_s), rtol=1e-1, atol=1e-1)
        np.testing.assert_allclose(np.asarray(out["end_logits"]),
                                   np.asarray(ref_e), rtol=1e-1, atol=1e-1)

    try:
        run_and_check("fast")
    except Exception:
        # Fall back to the concat-shift / default-pipelined variant if the
        # roll / single-buffer path fails to lower or validate on this part.
        run_and_check("safe")

    print("KERNEL_OK")
</pallas_src>

<mosaic_0001>
module attributes {stable_mosaic.version = 11 : i64} {
  func.func @kernel(%arg0: i32, %arg1: memref<1x16x32xbf16, #tpu.memory_space<vmem>>, %arg2: memref<160x32xbf16, #tpu.memory_space<vmem>>, %arg3: memref<160x16xbf16, #tpu.memory_space<vmem>>, %arg4: memref<80x8xbf16, #tpu.memory_space<vmem>>, %arg5: memref<40x4xbf16, #tpu.memory_space<vmem>>, %arg6: memref<4x2xbf16, #tpu.memory_space<vmem>>, %arg7: memref<1x640xf32, #tpu.memory_space<vmem>>, %arg8: memref<1x16x2xf32, #tpu.memory_space<vmem>>) attributes {dimension_semantics = [#tpu.dimension_semantics<parallel>], iteration_bounds = array<i64: 2>, scalar_prefetch = 0 : i64, scratch_operands = 0 : i64, tpu.core_type = #tpu.core_type<tc>, window_params = [{transform_indices = @transform_0, window_bounds = array<i64: 1, 16, 32>}, {pipeline_mode = #tpu.pipeline_mode<synchronous>, transform_indices = @transform_1, window_bounds = array<i64: 160, 32>}, {pipeline_mode = #tpu.pipeline_mode<synchronous>, transform_indices = @transform_2, window_bounds = array<i64: 160, 16>}, {pipeline_mode = #tpu.pipeline_mode<synchronous>, transform_indices = @transform_3, window_bounds = array<i64: 80, 8>}, {pipeline_mode = #tpu.pipeline_mode<synchronous>, transform_indices = @transform_4, window_bounds = array<i64: 40, 4>}, {pipeline_mode = #tpu.pipeline_mode<synchronous>, transform_indices = @transform_5, window_bounds = array<i64: 4, 2>}, {pipeline_mode = #tpu.pipeline_mode<synchronous>, transform_indices = @transform_6, window_bounds = array<i64: 1, 640>}, {transform_indices = @transform_7, window_bounds = array<i64: 1, 16, 2>}]} {
    %0 = tpu.iota {dimensions = array<i32: 0>} : vector<16x1xi32>
    %c16_i32 = arith.constant 16 : i32
    %c0_i32 = arith.constant 0 : i32
    %1 = arith.cmpi eq, %c16_i32, %c0_i32 : i32
    %c1_i32 = arith.constant 1 : i32
    %2 = arith.select %1, %c1_i32, %c16_i32 : i32
    %3 = vector.broadcast %2 : i32 to vector<16x1xi32>
    %4 = arith.remsi %0, %3 : vector<16x1xi32>
    %c0_i32_0 = arith.constant 0 : i32
    %5 = vector.broadcast %c0_i32_0 : i32 to vector<16x1xi32>
    %6 = arith.cmpi ne, %4, %5 : vector<16x1xi32>
    %c0_i32_1 = arith.constant 0 : i32
    %7 = vector.broadcast %c0_i32_1 : i32 to vector<16x1xi32>
    %8 = arith.cmpi slt, %4, %7 : vector<16x1xi32>
    %c0_i32_2 = arith.constant 0 : i32
    %9 = arith.cmpi slt, %2, %c0_i32_2 : i32
    %10 = vector.broadcast %9 : i1 to vector<16x1xi1>
    %11 = vector.broadcast %10 : vector<16x1xi1> to vector<16x1xi1>
    %12 = arith.xori %8, %11 : vector<16x1xi1>
    %13 = arith.andi %12, %6 : vector<16x1xi1>
    %14 = vector.broadcast %2 : i32 to vector<16x1xi32>
    %15 = arith.addi %4, %14 : vector<16x1xi32>
    %16 = arith.select %13, %15, %4 : vector<16x1xi1>, vector<16x1xi32>
    %c2_i32 = arith.constant 2 : i32
    %17 = vector.broadcast %c2_i32 : i32 to vector<16x1xi32>
    %18 = arith.cmpi sge, %16, %17 : vector<16x1xi32>
    %c1_i32_3 = arith.constant 1 : i32
    %19 = vector.broadcast %c1_i32_3 : i32 to vector<16x1xi32>
    %20 = arith.cmpi sge, %16, %19 : vector<16x1xi32>
    %c15_i32 = arith.constant 15 : i32
    %21 = vector.broadcast %c15_i32 : i32 to vector<16x1xi32>
    %22 = arith.cmpi slt, %16, %21 : vector<16x1xi32>
    %c14_i32 = arith.constant 14 : i32
    %23 = vector.broadcast %c14_i32 : i32 to vector<16x1xi32>
    %24 = arith.cmpi slt, %16, %23 : vector<16x1xi32>
    %c0 = arith.constant 0 : index
    %c0_4 = arith.constant 0 : index
    %c0_5 = arith.constant 0 : index
    %25 = vector.load %arg1[%c0, %c0_4, %c0_5] : memref<1x16x32xbf16, #tpu.memory_space<vmem>>, vector<1x16x32xbf16>
    %26 = vector.shape_cast %25 : vector<1x16x32xbf16> to vector<16x32xbf16>
    %c2_i32_6 = arith.constant 2 : i32
    %27 = tpu.dynamic_rotate %26 by %c2_i32_6 dim 0 : vector<16x32xbf16>, i32 -> vector<16x32xbf16>
    %cst = arith.constant 0.000000e+00 : bf16
    %28 = vector.broadcast %cst : bf16 to vector<16x32xbf16>
    %29 = vector.shape_cast %18 : vector<16x1xi1> to vector<16x1xi1>
    %30 = vector.broadcast %29 : vector<16x1xi1> to vector<16x32xi1>
    %31 = arith.select %30, %27, %28 : vector<16x32xi1>, vector<16x32xbf16>
    %c1_i32_7 = arith.constant 1 : i32
    %32 = tpu.dynamic_rotate %26 by %c1_i32_7 dim 0 : vector<16x32xbf16>, i32 -> vector<16x32xbf16>
    %cst_8 = arith.constant 0.000000e+00 : bf16
    %33 = vector.broadcast %cst_8 : bf16 to vector<16x32xbf16>
    %34 = vector.shape_cast %20 : vector<16x1xi1> to vector<16x1xi1>
    %35 = vector.broadcast %34 : vector<16x1xi1> to vector<16x32xi1>
    %36 = arith.select %35, %32, %33 : vector<16x32xi1>, vector<16x32xbf16>
    %c15_i32_9 = arith.constant 15 : i32
    %37 = tpu.dynamic_rotate %26 by %c15_i32_9 dim 0 : vector<16x32xbf16>, i32 -> vector<16x32xbf16>
    %cst_10 = arith.constant 0.000000e+00 : bf16
    %38 = vector.broadcast %cst_10 : bf16 to vector<16x32xbf16>
    %39 = vector.shape_cast %22 : vector<16x1xi1> to vector<16x1xi1>
    %40 = vector.broadcast %39 : vector<16x1xi1> to vector<16x32xi1>
    %41 = arith.select %40, %37, %38 : vector<16x32xi1>, vector<16x32xbf16>
    %c14_i32_11 = arith.constant 14 : i32
    %42 = tpu.dynamic_rotate %26 by %c14_i32_11 dim 0 : vector<16x32xbf16>, i32 -> vector<16x32xbf16>
    %cst_12 = arith.constant 0.000000e+00 : bf16
    %43 = vector.broadcast %cst_12 : bf16 to vector<16x32xbf16>
    %44 = vector.shape_cast %24 : vector<16x1xi1> to vector<16x1xi1>
    %45 = vector.broadcast %44 : vector<16x1xi1> to vector<16x32xi1>
    %46 = arith.select %45, %42, %43 : vector<16x32xi1>, vector<16x32xbf16>
    %47 = tpu.concatenate %31, %36, %26, %41, %46 in 1 : vector<16x32xbf16>, vector<16x32xbf16>, vector<16x32xbf16>, vector<16x32xbf16>, vector<16x32xbf16> -> vector<16x160xbf16>
    %c0_13 = arith.constant 0 : index
    %c0_14 = arith.constant 0 : index
    %48 = vector.load %arg2[%c0_13, %c0_14] : memref<160x32xbf16, #tpu.memory_space<vmem>>, vector<160x32xbf16>
    %cst_15 = arith.constant dense<0.000000e+00> : vector<16x32xf32>
    %49 = tpu.matmul %47, %48, %cst_15 {dimension_numbers = #tpu.dot_dimension_numbers<[1], [0], [0], [1], [0, 0, 1, 1], [], []>} : vector<16x160xbf16>, vector<160x32xbf16>, vector<16x32xf32> -> vector<16x32xf32>
    %c0_16 = arith.constant 0 : index
    %c0_17 = arith.constant 0 : index
    %50 = vector.load %arg7[%c0_16, %c0_17] : memref<1x640xf32, #tpu.memory_space<vmem>>, vector<1x32xf32>
    %51 = vector.broadcast %50 : vector<1x32xf32> to vector<16x32xf32>
    %52 = arith.addf %49, %51 : vector<16x32xf32>
    %cst_18 = arith.constant 0.000000e+00 : f32
    %53 = vector.broadcast %cst_18 : f32 to vector<16x32xf32>
    %54 = arith.cmpf oge, %52, %53 : vector<16x32xf32>
    %cst_19 = arith.constant 0.00999999977 : f32
    %55 = vector.broadcast %cst_19 : f32 to vector<16x32xf32>
    %56 = arith.mulf %55, %52 : vector<16x32xf32>
    %57 = arith.select %54, %52, %56 : vector<16x32xi1>, vector<16x32xf32>
    %58 = arith.truncf %57 : vector<16x32xf32> to vector<16x32xbf16>
    %c2_i32_20 = arith.constant 2 : i32
    %59 = tpu.dynamic_rotate %58 by %c2_i32_20 dim 0 : vector<16x32xbf16>, i32 -> vector<16x32xbf16>
    %cst_21 = arith.constant 0.000000e+00 : bf16
    %60 = vector.broadcast %cst_21 : bf16 to vector<16x32xbf16>
    %61 = vector.shape_cast %18 : vector<16x1xi1> to vector<16x1xi1>
    %62 = vector.broadcast %61 : vector<16x1xi1> to vector<16x32xi1>
    %63 = arith.select %62, %59, %60 : vector<16x32xi1>, vector<16x32xbf16>
    %c1_i32_22 = arith.constant 1 : i32
    %64 = tpu.dynamic_rotate %58 by %c1_i32_22 dim 0 : vector<16x32xbf16>, i32 -> vector<16x32xbf16>
    %cst_23 = arith.constant 0.000000e+00 : bf16
    %65 = vector.broadcast %cst_23 : bf16 to vector<16x32xbf16>
    %66 = vector.shape_cast %20 : vector<16x1xi1> to vector<16x1xi1>
    %67 = vector.broadcast %66 : vector<16x1xi1> to vector<16x32xi1>
    %68 = arith.select %67, %64, %65 : vector<16x32xi1>, vector<16x32xbf16>
    %c15_i32_24 = arith.constant 15 : i32
    %69 = tpu.dynamic_rotate %58 by %c15_i32_24 dim 0 : vector<16x32xbf16>, i32 -> vector<16x32xbf16>
    %cst_25 = arith.constant 0.000000e+00 : bf16
    %70 = vector.broadcast %cst_25 : bf16 to vector<16x32xbf16>
    %71 = vector.shape_cast %22 : vector<16x1xi1> to vector<16x1xi1>
    %72 = vector.broadcast %71 : vector<16x1xi1> to vector<16x32xi1>
    %73 = arith.select %72, %69, %70 : vector<16x32xi1>, vector<16x32xbf16>
    %c14_i32_26 = arith.constant 14 : i32
    %74 = tpu.dynamic_rotate %58 by %c14_i32_26 dim 0 : vector<16x32xbf16>, i32 -> vector<16x32xbf16>
    %cst_27 = arith.constant 0.000000e+00 : bf16
    %75 = vector.broadcast %cst_27 : bf16 to vector<16x32xbf16>
    %76 = vector.shape_cast %24 : vector<16x1xi1> to vector<16x1xi1>
    %77 = vector.broadcast %76 : vector<16x1xi1> to vector<16x32xi1>
    %78 = arith.select %77, %74, %75 : vector<16x32xi1>, vector<16x32xbf16>
    %79 = tpu.concatenate %63, %68, %58, %73, %78 in 1 : vector<16x32xbf16>, vector<16x32xbf16>, vector<16x32xbf16>, vector<16x32xbf16>, vector<16x32xbf16> -> vector<16x160xbf16>
    %c0_28 = arith.constant 0 : index
    %c0_29 = arith.constant 0 : index
    %80 = vector.load %arg3[%c0_28, %c0_29] : memref<160x16xbf16, #tpu.memory_space<vmem>>, vector<160x16xbf16>
    %cst_30 = arith.constant dense<0.000000e+00> : vector<16x16xf32>
    %81 = tpu.matmul %79, %80, %cst_30 {dimension_numbers = #tpu.dot_dimension_numbers<[1], [0], [0], [1], [0, 0, 1, 1], [], []>} : vector<16x160xbf16>, vector<160x16xbf16>, vector<16x16xf32> -> vector<16x16xf32>
    %c0_31 = arith.constant 0 : index
    %c128 = arith.constant 128 : index
    %82 = vector.load %arg7[%c0_31, %c128] : memref<1x640xf32, #tpu.memory_space<vmem>>, vector<1x16xf32>
    %83 = vector.broadcast %82 : vector<1x16xf32> to vector<16x16xf32>
    %84 = arith.addf %81, %83 : vector<16x16xf32>
    %cst_32 = arith.constant 0.000000e+00 : f32
    %85 = vector.broadcast %cst_32 : f32 to vector<16x16xf32>
    %86 = arith.cmpf oge, %84, %85 : vector<16x16xf32>
    %cst_33 = arith.constant 0.00999999977 : f32
    %87 = vector.broadcast %cst_33 : f32 to vector<16x16xf32>
    %88 = arith.mulf %87, %84 : vector<16x16xf32>
    %89 = arith.select %86, %84, %88 : vector<16x16xi1>, vector<16x16xf32>
    %90 = arith.truncf %89 : vector<16x16xf32> to vector<16x16xbf16>
    %c2_i32_34 = arith.constant 2 : i32
    %91 = tpu.dynamic_rotate %90 by %c2_i32_34 dim 0 : vector<16x16xbf16>, i32 -> vector<16x16xbf16>
    %cst_35 = arith.constant 0.000000e+00 : bf16
    %92 = vector.broadcast %cst_35 : bf16 to vector<16x16xbf16>
    %93 = vector.shape_cast %18 : vector<16x1xi1> to vector<16x1xi1>
    %94 = vector.broadcast %93 : vector<16x1xi1> to vector<16x16xi1>
    %95 = arith.select %94, %91, %92 : vector<16x16xi1>, vector<16x16xbf16>
    %c1_i32_36 = arith.constant 1 : i32
    %96 = tpu.dynamic_rotate %90 by %c1_i32_36 dim 0 : vector<16x16xbf16>, i32 -> vector<16x16xbf16>
    %cst_37 = arith.constant 0.000000e+00 : bf16
    %97 = vector.broadcast %cst_37 : bf16 to vector<16x16xbf16>
    %98 = vector.shape_cast %20 : vector<16x1xi1> to vector<16x1xi1>
    %99 = vector.broadcast %98 : vector<16x1xi1> to vector<16x16xi1>
    %100 = arith.select %99, %96, %97 : vector<16x16xi1>, vector<16x16xbf16>
    %c15_i32_38 = arith.constant 15 : i32
    %101 = tpu.dynamic_rotate %90 by %c15_i32_38 dim 0 : vector<16x16xbf16>, i32 -> vector<16x16xbf16>
    %cst_39 = arith.constant 0.000000e+00 : bf16
    %102 = vector.broadcast %cst_39 : bf16 to vector<16x16xbf16>
    %103 = vector.shape_cast %22 : vector<16x1xi1> to vector<16x1xi1>
    %104 = vector.broadcast %103 : vector<16x1xi1> to vector<16x16xi1>
    %105 = arith.select %104, %101, %102 : vector<16x16xi1>, vector<16x16xbf16>
    %c14_i32_40 = arith.constant 14 : i32
    %106 = tpu.dynamic_rotate %90 by %c14_i32_40 dim 0 : vector<16x16xbf16>, i32 -> vector<16x16xbf16>
    %cst_41 = arith.constant 0.000000e+00 : bf16
    %107 = vector.broadcast %cst_41 : bf16 to vector<16x16xbf16>
    %108 = vector.shape_cast %24 : vector<16x1xi1> to vector<16x1xi1>
    %109 = vector.broadcast %108 : vector<16x1xi1> to vector<16x16xi1>
    %110 = arith.select %109, %106, %107 : vector<16x16xi1>, vector<16x16xbf16>
    %111 = tpu.concatenate %95, %100, %90, %105, %110 in 1 : vector<16x16xbf16>, vector<16x16xbf16>, vector<16x16xbf16>, vector<16x16xbf16>, vector<16x16xbf16> -> vector<16x80xbf16>
    %c0_42 = arith.constant 0 : index
    %c0_43 = arith.constant 0 : index
    %112 = vector.load %arg4[%c0_42, %c0_43] : memref<80x8xbf16, #tpu.memory_space<vmem>>, vector<80x8xbf16>
    %cst_44 = arith.constant dense<0.000000e+00> : vector<16x8xf32>
    %113 = tpu.matmul %111, %112, %cst_44 {dimension_numbers = #tpu.dot_dimension_numbers<[1], [0], [0], [1], [0, 0, 1, 1], [], []>} : vector<16x80xbf16>, vector<80x8xbf16>, vector<16x8xf32> -> vector<16x8xf32>
    %c0_45 = arith.constant 0 : index
    %c256 = arith.constant 256 : index
    %114 = vector.load %arg7[%c0_45, %c256] : memref<1x640xf32, #tpu.memory_space<vmem>>, vector<1x8xf32>
    %115 = vector.broadcast %114 : vector<1x8xf32> to vector<16x8xf32>
    %116 = arith.addf %113, %115 : vector<16x8xf32>
    %cst_46 = arith.constant 0.000000e+00 : f32
    %117 = vector.broadcast %cst_46 : f32 to vector<16x8xf32>
    %118 = arith.cmpf oge, %116, %117 : vector<16x8xf32>
    %cst_47 = arith.constant 0.00999999977 : f32
    %119 = vector.broadcast %cst_47 : f32 to vector<16x8xf32>
    %120 = arith.mulf %119, %116 : vector<16x8xf32>
    %121 = arith.select %118, %116, %120 : vector<16x8xi1>, vector<16x8xf32>
    %122 = arith.truncf %121 : vector<16x8xf32> to vector<16x8xbf16>
    %c2_i32_48 = arith.constant 2 : i32
    %123 = tpu.dynamic_rotate %122 by %c2_i32_48 dim 0 : vector<16x8xbf16>, i32 -> vector<16x8xbf16>
    %cst_49 = arith.constant 0.000000e+00 : bf16
    %124 = vector.broadcast %cst_49 : bf16 to vector<16x8xbf16>
    %125 = vector.shape_cast %18 : vector<16x1xi1> to vector<16x1xi1>
    %126 = vector.broadcast %125 : vector<16x1xi1> to vector<16x8xi1>
    %127 = arith.select %126, %123, %124 : vector<16x8xi1>, vector<16x8xbf16>
    %c1_i32_50 = arith.constant 1 : i32
    %128 = tpu.dynamic_rotate %122 by %c1_i32_50 dim 0 : vector<16x8xbf16>, i32 -> vector<16x8xbf16>
    %cst_51 = arith.constant 0.000000e+00 : bf16
    %129 = vector.broadcast %cst_51 : bf16 to vector<16x8xbf16>
    %130 = vector.shape_cast %20 : vector<16x1xi1> to vector<16x1xi1>
    %131 = vector.broadcast %130 : vector<16x1xi1> to vector<16x8xi1>
    %132 = arith.select %131, %128, %129 : vector<16x8xi1>, vector<16x8xbf16>
    %c15_i32_52 = arith.constant 15 : i32
    %133 = tpu.dynamic_rotate %122 by %c15_i32_52 dim 0 : vector<16x8xbf16>, i32 -> vector<16x8xbf16>
    %cst_53 = arith.constant 0.000000e+00 : bf16
    %134 = vector.broadcast %cst_53 : bf16 to vector<16x8xbf16>
    %135 = vector.shape_cast %22 : vector<16x1xi1> to vector<16x1xi1>
    %136 = vector.broadcast %135 : vector<16x1xi1> to vector<16x8xi1>
    %137 = arith.select %136, %133, %134 : vector<16x8xi1>, vector<16x8xbf16>
    %c14_i32_54 = arith.constant 14 : i32
    %138 = tpu.dynamic_rotate %122 by %c14_i32_54 dim 0 : vector<16x8xbf16>, i32 -> vector<16x8xbf16>
    %cst_55 = arith.constant 0.000000e+00 : bf16
    %139 = vector.broadcast %cst_55 : bf16 to vector<16x8xbf16>
    %140 = vector.shape_cast %24 : vector<16x1xi1> to vector<16x1xi1>
    %141 = vector.broadcast %140 : vector<16x1xi1> to vector<16x8xi1>
    %142 = arith.select %141, %138, %139 : vector<16x8xi1>, vector<16x8xbf16>
    %143 = tpu.concatenate %127, %132, %122, %137, %142 in 1 : vector<16x8xbf16>, vector<16x8xbf16>, vector<16x8xbf16>, vector<16x8xbf16>, vector<16x8xbf16> -> vector<16x40xbf16>
    %c0_56 = arith.constant 0 : index
    %c0_57 = arith.constant 0 : index
    %144 = vector.load %arg5[%c0_56, %c0_57] : memref<40x4xbf16, #tpu.memory_space<vmem>>, vector<40x4xbf16>
    %cst_58 = arith.constant dense<0.000000e+00> : vector<16x4xf32>
    %145 = tpu.matmul %143, %144, %cst_58 {dimension_numbers = #tpu.dot_dimension_numbers<[1], [0], [0], [1], [0, 0, 1, 1], [], []>} : vector<16x40xbf16>, vector<40x4xbf16>, vector<16x4xf32> -> vector<16x4xf32>
    %c0_59 = arith.constant 0 : index
    %c384 = arith.constant 384 : index
    %146 = vector.load %arg7[%c0_59, %c384] : memref<1x640xf32, #tpu.memory_space<vmem>>, vector<1x4xf32>
    %147 = vector.broadcast %146 : vector<1x4xf32> to vector<16x4xf32>
    %148 = arith.addf %145, %147 : vector<16x4xf32>
    %cst_60 = arith.constant 0.000000e+00 : f32
    %149 = vector.broadcast %cst_60 : f32 to vector<16x4xf32>
    %150 = arith.cmpf oge, %148, %149 : vector<16x4xf32>
    %cst_61 = arith.constant 0.00999999977 : f32
    %151 = vector.broadcast %cst_61 : f32 to vector<16x4xf32>
    %152 = arith.mulf %151, %148 : vector<16x4xf32>
    %153 = arith.select %150, %148, %152 : vector<16x4xi1>, vector<16x4xf32>
    %154 = arith.truncf %153 : vector<16x4xf32> to vector<16x4xbf16>
    %c0_62 = arith.constant 0 : index
    %c0_63 = arith.constant 0 : index
    %155 = vector.load %arg6[%c0_62, %c0_63] : memref<4x2xbf16, #tpu.memory_space<vmem>>, vector<4x2xbf16>
    %cst_64 = arith.constant dense<0.000000e+00> : vector<16x2xf32>
    %156 = tpu.matmul %154, %155, %cst_64 {dimension_numbers = #tpu.dot_dimension_numbers<[1], [0], [0], [1], [0, 0, 1, 1], [], []>} : vector<16x4xbf16>, vector<4x2xbf16>, vector<16x2xf32> -> vector<16x2xf32>
    %c0_65 = arith.constant 0 : index
    %c512 = arith.constant 512 : index
    %157 = vector.load %arg7[%c0_65, %c512] : memref<1x640xf32, #tpu.memory_space<vmem>>, vector<1x2xf32>
    %158 = vector.broadcast %157 : vector<1x2xf32> to vector<16x2xf32>
    %159 = arith.addf %156, %158 : vector<16x2xf32>
    %160 = vector.shape_cast %159 : vector<16x2xf32> to vector<1x16x2xf32>
    %c0_66 = arith.constant 0 : index
    %c0_67 = arith.constant 0 : index
    %c0_68 = arith.constant 0 : index
    %161 = vector.load %arg8[%c0_66, %c0_67, %c0_68] : memref<1x16x2xf32, #tpu.memory_space<vmem>>, vector<1x16x2xf32>
    tpu.vector_store %arg8[%c0_66, %c0_67, %c0_68], %160 {strides = array<i32>} : memref<1x16x2xf32, #tpu.memory_space<vmem>>, vector<1x16x2xf32>,
    return
  }
  func.func @transform_0(%arg0: i32) -> (i32, i32, i32) {
    %c0_i32 = arith.constant 0 : i32
    %c0_i32_0 = arith.constant 0 : i32
    %c0_i32_1 = arith.constant 0 : i32
    return %arg0, %c0_i32, %c0_i32_0 : i32, i32, i32
  }
  func.func @transform_1(%arg0: i32) -> (i32, i32) {
    %c0_i32 = arith.constant 0 : i32
    %c0_i32_0 = arith.constant 0 : i32
    %c0_i32_1 = arith.constant 0 : i32
    return %c0_i32, %c0_i32_0 : i32, i32
  }
  func.func @transform_2(%arg0: i32) -> (i32, i32) {
    %c0_i32 = arith.constant 0 : i32
    %c0_i32_0 = arith.constant 0 : i32
    %c0_i32_1 = arith.constant 0 : i32
    return %c0_i32, %c0_i32_0 : i32, i32
  }
  func.func @transform_3(%arg0: i32) -> (i32, i32) {
    %c0_i32 = arith.constant 0 : i32
    %c0_i32_0 = arith.constant 0 : i32
    %c0_i32_1 = arith.constant 0 : i32
    return %c0_i32, %c0_i32_0 : i32, i32
  }
  func.func @transform_4(%arg0: i32) -> (i32, i32) {
    %c0_i32 = arith.constant 0 : i32
    %c0_i32_0 = arith.constant 0 : i32
    %c0_i32_1 = arith.constant 0 : i32
    return %c0_i32, %c0_i32_0 : i32, i32
  }
  func.func @transform_5(%arg0: i32) -> (i32, i32) {
    %c0_i32 = arith.constant 0 : i32
    %c0_i32_0 = arith.constant 0 : i32
    %c0_i32_1 = arith.constant 0 : i32
    return %c0_i32, %c0_i32_0 : i32, i32
  }
  func.func @transform_6(%arg0: i32) -> (i32, i32) {
    %c0_i32 = arith.constant 0 : i32
    %c0_i32_0 = arith.constant 0 : i32
    %c0_i32_1 = arith.constant 0 : i32
    return %c0_i32, %c0_i32_0 : i32, i32
  }
  func.func @transform_7(%arg0: i32) -> (i32, i32, i32) {
    %c0_i32 = arith.constant 0 : i32
    %c0_i32_0 = arith.constant 0 : i32
    %c0_i32_1 = arith.constant 0 : i32
    return %arg0, %c0_i32, %c0_i32_0 : i32, i32, i32
  }
}

module attributes {stable_mosaic.version = 11 : i64} {
  func.func @kernel(%arg0: i32, %arg1: memref<1x16x32xbf16, #tpu.memory_space<vmem>>, %arg2: memref<160x32xbf16, #tpu.memory_space<vmem>>, %arg3: memref<160x16xbf16, #tpu.memory_space<vmem>>, %arg4: memref<80x8xbf16, #tpu.memory_space<vmem>>, %arg5: memref<40x4xbf16, #tpu.memory_space<vmem>>, %arg6: memref<4x2xbf16, #tpu.memory_space<vmem>>, %arg7: memref<1x640xf32, #tpu.memory_space<vmem>>, %arg8: memref<1x16x2xf32, #tpu.memory_space<vmem>>) attributes {dimension_semantics = [#tpu.dimension_semantics<parallel>], iteration_bounds = array<i64: 2>, scalar_prefetch = 0 : i64, scratch_operands = 0 : i64, tpu.core_type = #tpu.core_type<tc>, window_params = [{transform_indices = @transform_0, window_bounds = array<i64: 1, 16, 32>}, {pipeline_mode = #tpu.pipeline_mode<synchronous>, transform_indices = @transform_1, window_bounds = array<i64: 160, 32>}, {pipeline_mode = #tpu.pipeline_mode<synchronous>, transform_indices = @transform_2, window_bounds = array<i64: 160, 16>}, {pipeline_mode = #tpu.pipeline_mode<synchronous>, transform_indices = @transform_3, window_bounds = array<i64: 80, 8>}, {pipeline_mode = #tpu.pipeline_mode<synchronous>, transform_indices = @transform_4, window_bounds = array<i64: 40, 4>}, {pipeline_mode = #tpu.pipeline_mode<synchronous>, transform_indices = @transform_5, window_bounds = array<i64: 4, 2>}, {pipeline_mode = #tpu.pipeline_mode<synchronous>, transform_indices = @transform_6, window_bounds = array<i64: 1, 640>}, {transform_indices = @transform_7, window_bounds = array<i64: 1, 16, 2>}]} {
    %0 = tpu.iota {dimensions = array<i32: 0>} : vector<16x1xi32>
    %c16_i32 = arith.constant 16 : i32
    %c0_i32 = arith.constant 0 : i32
    %1 = arith.cmpi eq, %c16_i32, %c0_i32 : i32
    %c1_i32 = arith.constant 1 : i32
    %2 = arith.select %1, %c1_i32, %c16_i32 : i32
    %3 = vector.broadcast %2 : i32 to vector<16x1xi32>
    %4 = arith.remsi %0, %3 : vector<16x1xi32>
    %c0_i32_0 = arith.constant 0 : i32
    %5 = vector.broadcast %c0_i32_0 : i32 to vector<16x1xi32>
    %6 = arith.cmpi ne, %4, %5 : vector<16x1xi32>
    %c0_i32_1 = arith.constant 0 : i32
    %7 = vector.broadcast %c0_i32_1 : i32 to vector<16x1xi32>
    %8 = arith.cmpi slt, %4, %7 : vector<16x1xi32>
    %c0_i32_2 = arith.constant 0 : i32
    %9 = arith.cmpi slt, %2, %c0_i32_2 : i32
    %10 = vector.broadcast %9 : i1 to vector<16x1xi1>
    %11 = vector.broadcast %10 : vector<16x1xi1> to vector<16x1xi1>
    %12 = arith.xori %8, %11 : vector<16x1xi1>
    %13 = arith.andi %12, %6 : vector<16x1xi1>
    %14 = vector.broadcast %2 : i32 to vector<16x1xi32>
    %15 = arith.addi %4, %14 : vector<16x1xi32>
    %16 = arith.select %13, %15, %4 : vector<16x1xi1>, vector<16x1xi32>
    %c2_i32 = arith.constant 2 : i32
    %17 = vector.broadcast %c2_i32 : i32 to vector<16x1xi32>
    %18 = arith.cmpi sge, %16, %17 : vector<16x1xi32>
    %c1_i32_3 = arith.constant 1 : i32
    %19 = vector.broadcast %c1_i32_3 : i32 to vector<16x1xi32>
    %20 = arith.cmpi sge, %16, %19 : vector<16x1xi32>
    %c15_i32 = arith.constant 15 : i32
    %21 = vector.broadcast %c15_i32 : i32 to vector<16x1xi32>
    %22 = arith.cmpi slt, %16, %21 : vector<16x1xi32>
    %c14_i32 = arith.constant 14 : i32
    %23 = vector.broadcast %c14_i32 : i32 to vector<16x1xi32>
    %24 = arith.cmpi slt, %16, %23 : vector<16x1xi32>
    %c0 = arith.constant 0 : index
    %c0_4 = arith.constant 0 : index
    %c0_5 = arith.constant 0 : index
    %25 = vector.load %arg1[%c0, %c0_4, %c0_5] : memref<1x16x32xbf16, #tpu.memory_space<vmem>>, vector<1x16x32xbf16>
    %26 = vector.shape_cast %25 : vector<1x16x32xbf16> to vector<16x32xbf16>
    %cst = arith.constant 0.000000e+00 : bf16
    %27 = vector.broadcast %cst : bf16 to vector<2x32xbf16>
    %28 = vector.extract_strided_slice %26 {offsets = [0, 0], sizes = [14, 32], strides = [1, 1]} : vector<16x32xbf16> to vector<14x32xbf16>
    %29 = tpu.concatenate %27, %28 in 0 : vector<2x32xbf16>, vector<14x32xbf16> -> vector<16x32xbf16>
    %cst_6 = arith.constant 0.000000e+00 : bf16
    %30 = vector.broadcast %cst_6 : bf16 to vector<16x32xbf16>
    %31 = vector.shape_cast %18 : vector<16x1xi1> to vector<16x1xi1>
    %32 = vector.broadcast %31 : vector<16x1xi1> to vector<16x32xi1>
    %33 = arith.select %32, %29, %30 : vector<16x32xi1>, vector<16x32xbf16>
    %cst_7 = arith.constant 0.000000e+00 : bf16
    %34 = vector.broadcast %cst_7 : bf16 to vector<1x32xbf16>
    %35 = vector.extract_strided_slice %26 {offsets = [0, 0], sizes = [15, 32], strides = [1, 1]} : vector<16x32xbf16> to vector<15x32xbf16>
    %36 = tpu.concatenate %34, %35 in 0 : vector<1x32xbf16>, vector<15x32xbf16> -> vector<16x32xbf16>
    %cst_8 = arith.constant 0.000000e+00 : bf16
    %37 = vector.broadcast %cst_8 : bf16 to vector<16x32xbf16>
    %38 = vector.shape_cast %20 : vector<16x1xi1> to vector<16x1xi1>
    %39 = vector.broadcast %38 : vector<16x1xi1> to vector<16x32xi1>
    %40 = arith.select %39, %36, %37 : vector<16x32xi1>, vector<16x32xbf16>
    %cst_9 = arith.constant 0.000000e+00 : bf16
    %41 = vector.broadcast %cst_9 : bf16 to vector<1x32xbf16>
    %42 = vector.extract_strided_slice %26 {offsets = [1, 0], sizes = [15, 32], strides = [1, 1]} : vector<16x32xbf16> to vector<15x32xbf16>
    %43 = tpu.concatenate %42, %41 in 0 : vector<15x32xbf16>, vector<1x32xbf16> -> vector<16x32xbf16>
    %cst_10 = arith.constant 0.000000e+00 : bf16
    %44 = vector.broadcast %cst_10 : bf16 to vector<16x32xbf16>
    %45 = vector.shape_cast %22 : vector<16x1xi1> to vector<16x1xi1>
    %46 = vector.broadcast %45 : vector<16x1xi1> to vector<16x32xi1>
    %47 = arith.select %46, %43, %44 : vector<16x32xi1>, vector<16x32xbf16>
    %cst_11 = arith.constant 0.000000e+00 : bf16
    %48 = vector.broadcast %cst_11 : bf16 to vector<2x32xbf16>
    %49 = vector.extract_strided_slice %26 {offsets = [2, 0], sizes = [14, 32], strides = [1, 1]} : vector<16x32xbf16> to vector<14x32xbf16>
    %50 = tpu.concatenate %49, %48 in 0 : vector<14x32xbf16>, vector<2x32xbf16> -> vector<16x32xbf16>
    %cst_12 = arith.constant 0.000000e+00 : bf16
    %51 = vector.broadcast %cst_12 : bf16 to vector<16x32xbf16>
    %52 = vector.shape_cast %24 : vector<16x1xi1> to vector<16x1xi1>
    %53 = vector.broadcast %52 : vector<16x1xi1> to vector<16x32xi1>
    %54 = arith.select %53, %50, %51 : vector<16x32xi1>, vector<16x32xbf16>
    %55 = tpu.concatenate %33, %40, %26, %47, %54 in 1 : vector<16x32xbf16>, vector<16x32xbf16>, vector<16x32xbf16>, vector<16x32xbf16>, vector<16x32xbf16> -> vector<16x160xbf16>
    %c0_13 = arith.constant 0 : index
    %c0_14 = arith.constant 0 : index
    %56 = vector.load %arg2[%c0_13, %c0_14] : memref<160x32xbf16, #tpu.memory_space<vmem>>, vector<160x32xbf16>
    %cst_15 = arith.constant dense<0.000000e+00> : vector<16x32xf32>
    %57 = tpu.matmul %55, %56, %cst_15 {dimension_numbers = #tpu.dot_dimension_numbers<[1], [0], [0], [1], [0, 0, 1, 1], [], []>} : vector<16x160xbf16>, vector<160x32xbf16>, vector<16x32xf32> -> vector<16x32xf32>
    %c0_16 = arith.constant 0 : index
    %c0_17 = arith.constant 0 : index
    %58 = vector.load %arg7[%c0_16, %c0_17] : memref<1x640xf32, #tpu.memory_space<vmem>>, vector<1x32xf32>
    %59 = vector.broadcast %58 : vector<1x32xf32> to vector<16x32xf32>
    %60 = arith.addf %57, %59 : vector<16x32xf32>
    %cst_18 = arith.constant 0.000000e+00 : f32
    %61 = vector.broadcast %cst_18 : f32 to vector<16x32xf32>
    %62 = arith.cmpf oge, %60, %61 : vector<16x32xf32>
    %cst_19 = arith.constant 0.00999999977 : f32
    %63 = vector.broadcast %cst_19 : f32 to vector<16x32xf32>
    %64 = arith.mulf %63, %60 : vector<16x32xf32>
    %65 = arith.select %62, %60, %64 : vector<16x32xi1>, vector<16x32xf32>
    %66 = arith.truncf %65 : vector<16x32xf32> to vector<16x32xbf16>
    %cst_20 = arith.constant 0.000000e+00 : bf16
    %67 = vector.broadcast %cst_20 : bf16 to vector<2x32xbf16>
    %68 = vector.extract_strided_slice %66 {offsets = [0, 0], sizes = [14, 32], strides = [1, 1]} : vector<16x32xbf16> to vector<14x32xbf16>
    %69 = tpu.concatenate %67, %68 in 0 : vector<2x32xbf16>, vector<14x32xbf16> -> vector<16x32xbf16>
    %cst_21 = arith.constant 0.000000e+00 : bf16
    %70 = vector.broadcast %cst_21 : bf16 to vector<16x32xbf16>
    %71 = vector.shape_cast %18 : vector<16x1xi1> to vector<16x1xi1>
    %72 = vector.broadcast %71 : vector<16x1xi1> to vector<16x32xi1>
    %73 = arith.select %72, %69, %70 : vector<16x32xi1>, vector<16x32xbf16>
    %cst_22 = arith.constant 0.000000e+00 : bf16
    %74 = vector.broadcast %cst_22 : bf16 to vector<1x32xbf16>
    %75 = vector.extract_strided_slice %66 {offsets = [0, 0], sizes = [15, 32], strides = [1, 1]} : vector<16x32xbf16> to vector<15x32xbf16>
    %76 = tpu.concatenate %74, %75 in 0 : vector<1x32xbf16>, vector<15x32xbf16> -> vector<16x32xbf16>
    %cst_23 = arith.constant 0.000000e+00 : bf16
    %77 = vector.broadcast %cst_23 : bf16 to vector<16x32xbf16>
    %78 = vector.shape_cast %20 : vector<16x1xi1> to vector<16x1xi1>
    %79 = vector.broadcast %78 : vector<16x1xi1> to vector<16x32xi1>
    %80 = arith.select %79, %76, %77 : vector<16x32xi1>, vector<16x32xbf16>
    %cst_24 = arith.constant 0.000000e+00 : bf16
    %81 = vector.broadcast %cst_24 : bf16 to vector<1x32xbf16>
    %82 = vector.extract_strided_slice %66 {offsets = [1, 0], sizes = [15, 32], strides = [1, 1]} : vector<16x32xbf16> to vector<15x32xbf16>
    %83 = tpu.concatenate %82, %81 in 0 : vector<15x32xbf16>, vector<1x32xbf16> -> vector<16x32xbf16>
    %cst_25 = arith.constant 0.000000e+00 : bf16
    %84 = vector.broadcast %cst_25 : bf16 to vector<16x32xbf16>
    %85 = vector.shape_cast %22 : vector<16x1xi1> to vector<16x1xi1>
    %86 = vector.broadcast %85 : vector<16x1xi1> to vector<16x32xi1>
    %87 = arith.select %86, %83, %84 : vector<16x32xi1>, vector<16x32xbf16>
    %cst_26 = arith.constant 0.000000e+00 : bf16
    %88 = vector.broadcast %cst_26 : bf16 to vector<2x32xbf16>
    %89 = vector.extract_strided_slice %66 {offsets = [2, 0], sizes = [14, 32], strides = [1, 1]} : vector<16x32xbf16> to vector<14x32xbf16>
    %90 = tpu.concatenate %89, %88 in 0 : vector<14x32xbf16>, vector<2x32xbf16> -> vector<16x32xbf16>
    %cst_27 = arith.constant 0.000000e+00 : bf16
    %91 = vector.broadcast %cst_27 : bf16 to vector<16x32xbf16>
    %92 = vector.shape_cast %24 : vector<16x1xi1> to vector<16x1xi1>
    %93 = vector.broadcast %92 : vector<16x1xi1> to vector<16x32xi1>
    %94 = arith.select %93, %90, %91 : vector<16x32xi1>, vector<16x32xbf16>
    %95 = tpu.concatenate %73, %80, %66, %87, %94 in 1 : vector<16x32xbf16>, vector<16x32xbf16>, vector<16x32xbf16>, vector<16x32xbf16>, vector<16x32xbf16> -> vector<16x160xbf16>
    %c0_28 = arith.constant 0 : index
    %c0_29 = arith.constant 0 : index
    %96 = vector.load %arg3[%c0_28, %c0_29] : memref<160x16xbf16, #tpu.memory_space<vmem>>, vector<160x16xbf16>
    %cst_30 = arith.constant dense<0.000000e+00> : vector<16x16xf32>
    %97 = tpu.matmul %95, %96, %cst_30 {dimension_numbers = #tpu.dot_dimension_numbers<[1], [0], [0], [1], [0, 0, 1, 1], [], []>} : vector<16x160xbf16>, vector<160x16xbf16>, vector<16x16xf32> -> vector<16x16xf32>
    %c0_31 = arith.constant 0 : index
    %c128 = arith.constant 128 : index
    %98 = vector.load %arg7[%c0_31, %c128] : memref<1x640xf32, #tpu.memory_space<vmem>>, vector<1x16xf32>
    %99 = vector.broadcast %98 : vector<1x16xf32> to vector<16x16xf32>
    %100 = arith.addf %97, %99 : vector<16x16xf32>
    %cst_32 = arith.constant 0.000000e+00 : f32
    %101 = vector.broadcast %cst_32 : f32 to vector<16x16xf32>
    %102 = arith.cmpf oge, %100, %101 : vector<16x16xf32>
    %cst_33 = arith.constant 0.00999999977 : f32
    %103 = vector.broadcast %cst_33 : f32 to vector<16x16xf32>
    %104 = arith.mulf %103, %100 : vector<16x16xf32>
    %105 = arith.select %102, %100, %104 : vector<16x16xi1>, vector<16x16xf32>
    %106 = arith.truncf %105 : vector<16x16xf32> to vector<16x16xbf16>
    %cst_34 = arith.constant 0.000000e+00 : bf16
    %107 = vector.broadcast %cst_34 : bf16 to vector<2x16xbf16>
    %108 = vector.extract_strided_slice %106 {offsets = [0, 0], sizes = [14, 16], strides = [1, 1]} : vector<16x16xbf16> to vector<14x16xbf16>
    %109 = tpu.concatenate %107, %108 in 0 : vector<2x16xbf16>, vector<14x16xbf16> -> vector<16x16xbf16>
    %cst_35 = arith.constant 0.000000e+00 : bf16
    %110 = vector.broadcast %cst_35 : bf16 to vector<16x16xbf16>
    %111 = vector.shape_cast %18 : vector<16x1xi1> to vector<16x1xi1>
    %112 = vector.broadcast %111 : vector<16x1xi1> to vector<16x16xi1>
    %113 = arith.select %112, %109, %110 : vector<16x16xi1>, vector<16x16xbf16>
    %cst_36 = arith.constant 0.000000e+00 : bf16
    %114 = vector.broadcast %cst_36 : bf16 to vector<1x16xbf16>
    %115 = vector.extract_strided_slice %106 {offsets = [0, 0], sizes = [15, 16], strides = [1, 1]} : vector<16x16xbf16> to vector<15x16xbf16>
    %116 = tpu.concatenate %114, %115 in 0 : vector<1x16xbf16>, vector<15x16xbf16> -> vector<16x16xbf16>
    %cst_37 = arith.constant 0.000000e+00 : bf16
    %117 = vector.broadcast %cst_37 : bf16 to vector<16x16xbf16>
    %118 = vector.shape_cast %20 : vector<16x1xi1> to vector<16x1xi1>
    %119 = vector.broadcast %118 : vector<16x1xi1> to vector<16x16xi1>
    %120 = arith.select %119, %116, %117 : vector<16x16xi1>, vector<16x16xbf16>
    %cst_38 = arith.constant 0.000000e+00 : bf16
    %121 = vector.broadcast %cst_38 : bf16 to vector<1x16xbf16>
    %122 = vector.extract_strided_slice %106 {offsets = [1, 0], sizes = [15, 16], strides = [1, 1]} : vector<16x16xbf16> to vector<15x16xbf16>
    %123 = tpu.concatenate %122, %121 in 0 : vector<15x16xbf16>, vector<1x16xbf16> -> vector<16x16xbf16>
    %cst_39 = arith.constant 0.000000e+00 : bf16
    %124 = vector.broadcast %cst_39 : bf16 to vector<16x16xbf16>
    %125 = vector.shape_cast %22 : vector<16x1xi1> to vector<16x1xi1>
    %126 = vector.broadcast %125 : vector<16x1xi1> to vector<16x16xi1>
    %127 = arith.select %126, %123, %124 : vector<16x16xi1>, vector<16x16xbf16>
    %cst_40 = arith.constant 0.000000e+00 : bf16
    %128 = vector.broadcast %cst_40 : bf16 to vector<2x16xbf16>
    %129 = vector.extract_strided_slice %106 {offsets = [2, 0], sizes = [14, 16], strides = [1, 1]} : vector<16x16xbf16> to vector<14x16xbf16>
    %130 = tpu.concatenate %129, %128 in 0 : vector<14x16xbf16>, vector<2x16xbf16> -> vector<16x16xbf16>
    %cst_41 = arith.constant 0.000000e+00 : bf16
    %131 = vector.broadcast %cst_41 : bf16 to vector<16x16xbf16>
    %132 = vector.shape_cast %24 : vector<16x1xi1> to vector<16x1xi1>
    %133 = vector.broadcast %132 : vector<16x1xi1> to vector<16x16xi1>
    %134 = arith.select %133, %130, %131 : vector<16x16xi1>, vector<16x16xbf16>
    %135 = tpu.concatenate %113, %120, %106, %127, %134 in 1 : vector<16x16xbf16>, vector<16x16xbf16>, vector<16x16xbf16>, vector<16x16xbf16>, vector<16x16xbf16> -> vector<16x80xbf16>
    %c0_42 = arith.constant 0 : index
    %c0_43 = arith.constant 0 : index
    %136 = vector.load %arg4[%c0_42, %c0_43] : memref<80x8xbf16, #tpu.memory_space<vmem>>, vector<80x8xbf16>
    %cst_44 = arith.constant dense<0.000000e+00> : vector<16x8xf32>
    %137 = tpu.matmul %135, %136, %cst_44 {dimension_numbers = #tpu.dot_dimension_numbers<[1], [0], [0], [1], [0, 0, 1, 1], [], []>} : vector<16x80xbf16>, vector<80x8xbf16>, vector<16x8xf32> -> vector<16x8xf32>
    %c0_45 = arith.constant 0 : index
    %c256 = arith.constant 256 : index
    %138 = vector.load %arg7[%c0_45, %c256] : memref<1x640xf32, #tpu.memory_space<vmem>>, vector<1x8xf32>
    %139 = vector.broadcast %138 : vector<1x8xf32> to vector<16x8xf32>
    %140 = arith.addf %137, %139 : vector<16x8xf32>
    %cst_46 = arith.constant 0.000000e+00 : f32
    %141 = vector.broadcast %cst_46 : f32 to vector<16x8xf32>
    %142 = arith.cmpf oge, %140, %141 : vector<16x8xf32>
    %cst_47 = arith.constant 0.00999999977 : f32
    %143 = vector.broadcast %cst_47 : f32 to vector<16x8xf32>
    %144 = arith.mulf %143, %140 : vector<16x8xf32>
    %145 = arith.select %142, %140, %144 : vector<16x8xi1>, vector<16x8xf32>
    %146 = arith.truncf %145 : vector<16x8xf32> to vector<16x8xbf16>
    %cst_48 = arith.constant 0.000000e+00 : bf16
    %147 = vector.broadcast %cst_48 : bf16 to vector<2x8xbf16>
    %148 = vector.extract_strided_slice %146 {offsets = [0, 0], sizes = [14, 8], strides = [1, 1]} : vector<16x8xbf16> to vector<14x8xbf16>
    %149 = tpu.concatenate %147, %148 in 0 : vector<2x8xbf16>, vector<14x8xbf16> -> vector<16x8xbf16>
    %cst_49 = arith.constant 0.000000e+00 : bf16
    %150 = vector.broadcast %cst_49 : bf16 to vector<16x8xbf16>
    %151 = vector.shape_cast %18 : vector<16x1xi1> to vector<16x1xi1>
    %152 = vector.broadcast %151 : vector<16x1xi1> to vector<16x8xi1>
    %153 = arith.select %152, %149, %150 : vector<16x8xi1>, vector<16x8xbf16>
    %cst_50 = arith.constant 0.000000e+00 : bf16
    %154 = vector.broadcast %cst_50 : bf16 to vector<1x8xbf16>
    %155 = vector.extract_strided_slice %146 {offsets = [0, 0], sizes = [15, 8], strides = [1, 1]} : vector<16x8xbf16> to vector<15x8xbf16>
    %156 = tpu.concatenate %154, %155 in 0 : vector<1x8xbf16>, vector<15x8xbf16> -> vector<16x8xbf16>
    %cst_51 = arith.constant 0.000000e+00 : bf16
    %157 = vector.broadcast %cst_51 : bf16 to vector<16x8xbf16>
    %158 = vector.shape_cast %20 : vector<16x1xi1> to vector<16x1xi1>
    %159 = vector.broadcast %158 : vector<16x1xi1> to vector<16x8xi1>
    %160 = arith.select %159, %156, %157 : vector<16x8xi1>, vector<16x8xbf16>
    %cst_52 = arith.constant 0.000000e+00 : bf16
    %161 = vector.broadcast %cst_52 : bf16 to vector<1x8xbf16>
    %162 = vector.extract_strided_slice %146 {offsets = [1, 0], sizes = [15, 8], strides = [1, 1]} : vector<16x8xbf16> to vector<15x8xbf16>
    %163 = tpu.concatenate %162, %161 in 0 : vector<15x8xbf16>, vector<1x8xbf16> -> vector<16x8xbf16>
    %cst_53 = arith.constant 0.000000e+00 : bf16
    %164 = vector.broadcast %cst_53 : bf16 to vector<16x8xbf16>
    %165 = vector.shape_cast %22 : vector<16x1xi1> to vector<16x1xi1>
    %166 = vector.broadcast %165 : vector<16x1xi1> to vector<16x8xi1>
    %167 = arith.select %166, %163, %164 : vector<16x8xi1>, vector<16x8xbf16>
    %cst_54 = arith.constant 0.000000e+00 : bf16
    %168 = vector.broadcast %cst_54 : bf16 to vector<2x8xbf16>
    %169 = vector.extract_strided_slice %146 {offsets = [2, 0], sizes = [14, 8], strides = [1, 1]} : vector<16x8xbf16> to vector<14x8xbf16>
    %170 = tpu.concatenate %169, %168 in 0 : vector<14x8xbf16>, vector<2x8xbf16> -> vector<16x8xbf16>
    %cst_55 = arith.constant 0.000000e+00 : bf16
    %171 = vector.broadcast %cst_55 : bf16 to vector<16x8xbf16>
    %172 = vector.shape_cast %24 : vector<16x1xi1> to vector<16x1xi1>
    %173 = vector.broadcast %172 : vector<16x1xi1> to vector<16x8xi1>
    %174 = arith.select %173, %170, %171 : vector<16x8xi1>, vector<16x8xbf16>
    %175 = tpu.concatenate %153, %160, %146, %167, %174 in 1 : vector<16x8xbf16>, vector<16x8xbf16>, vector<16x8xbf16>, vector<16x8xbf16>, vector<16x8xbf16> -> vector<16x40xbf16>
    %c0_56 = arith.constant 0 : index
    %c0_57 = arith.constant 0 : index
    %176 = vector.load %arg5[%c0_56, %c0_57] : memref<40x4xbf16, #tpu.memory_space<vmem>>, vector<40x4xbf16>
    %cst_58 = arith.constant dense<0.000000e+00> : vector<16x4xf32>
    %177 = tpu.matmul %175, %176, %cst_58 {dimension_numbers = #tpu.dot_dimension_numbers<[1], [0], [0], [1], [0, 0, 1, 1], [], []>} : vector<16x40xbf16>, vector<40x4xbf16>, vector<16x4xf32> -> vector<16x4xf32>
    %c0_59 = arith.constant 0 : index
    %c384 = arith.constant 384 : index
    %178 = vector.load %arg7[%c0_59, %c384] : memref<1x640xf32, #tpu.memory_space<vmem>>, vector<1x4xf32>
    %179 = vector.broadcast %178 : vector<1x4xf32> to vector<16x4xf32>
    %180 = arith.addf %177, %179 : vector<16x4xf32>
    %cst_60 = arith.constant 0.000000e+00 : f32
    %181 = vector.broadcast %cst_60 : f32 to vector<16x4xf32>
    %182 = arith.cmpf oge, %180, %181 : vector<16x4xf32>
    %cst_61 = arith.constant 0.00999999977 : f32
    %183 = vector.broadcast %cst_61 : f32 to vector<16x4xf32>
    %184 = arith.mulf %183, %180 : vector<16x4xf32>
    %185 = arith.select %182, %180, %184 : vector<16x4xi1>, vector<16x4xf32>
    %186 = arith.truncf %185 : vector<16x4xf32> to vector<16x4xbf16>
    %c0_62 = arith.constant 0 : index
    %c0_63 = arith.constant 0 : index
    %187 = vector.load %arg6[%c0_62, %c0_63] : memref<4x2xbf16, #tpu.memory_space<vmem>>, vector<4x2xbf16>
    %cst_64 = arith.constant dense<0.000000e+00> : vector<16x2xf32>
    %188 = tpu.matmul %186, %187, %cst_64 {dimension_numbers = #tpu.dot_dimension_numbers<[1], [0], [0], [1], [0, 0, 1, 1], [], []>} : vector<16x4xbf16>, vector<4x2xbf16>, vector<16x2xf32> -> vector<16x2xf32>
    %c0_65 = arith.constant 0 : index
    %c512 = arith.constant 512 : index
    %189 = vector.load %arg7[%c0_65, %c512] : memref<1x640xf32, #tpu.memory_space<vmem>>, vector<1x2xf32>
    %190 = vector.broadcast %189 : vector<1x2xf32> to vector<16x2xf32>
    %191 = arith.addf %188, %190 : vector<16x2xf32>
    %192 = vector.shape_cast %191 : vector<16x2xf32> to vector<1x16x2xf32>
    %c0_66 = arith.constant 0 : index
    %c0_67 = arith.constant 0 : index
    %c0_68 = arith.constant 0 : index
    %193 = vector.load %arg8[%c0_66, %c0_67, %c0_68] : memref<1x16x2xf32, #tpu.memory_space<vmem>>, vector<1x16x2xf32>
    tpu.vector_store %arg8[%c0_66, %c0_67, %c0_68], %192 {strides = array<i32>} : memref<1x16x2xf32, #tpu.memory_space<vmem>>, vector<1x16x2xf32>,
    return
  }
  func.func @transform_0(%arg0: i32) -> (i32, i32, i32) {
    %c0_i32 = arith.constant 0 : i32
    %c0_i32_0 = arith.constant 0 : i32
    %c0_i32_1 = arith.constant 0 : i32
    return %arg0, %c0_i32, %c0_i32_0 : i32, i32, i32
  }
  func.func @transform_1(%arg0: i32) -> (i32, i32) {
    %c0_i32 = arith.constant 0 : i32
    %c0_i32_0 = arith.constant 0 : i32
    %c0_i32_1 = arith.constant 0 : i32
    return %c0_i32, %c0_i32_0 : i32, i32
  }
  func.func @transform_2(%arg0: i32) -> (i32, i32) {
    %c0_i32 = arith.constant 0 : i32
    %c0_i32_0 = arith.constant 0 : i32
    %c0_i32_1 = arith.constant 0 : i32
    return %c0_i32, %c0_i32_0 : i32, i32
  }
  func.func @transform_3(%arg0: i32) -> (i32, i32) {
    %c0_i32 = arith.constant 0 : i32
    %c0_i32_0 = arith.constant 0 : i32
    %c0_i32_1 = arith.constant 0 : i32
    return %c0_i32, %c0_i32_0 : i32, i32
  }
  func.func @transform_4(%arg0: i32) -> (i32, i32) {
    %c0_i32 = arith.constant 0 : i32
    %c0_i32_0 = arith.constant 0 : i32
    %c0_i32_1 = arith.constant 0 : i32
    return %c0_i32, %c0_i32_0 : i32, i32
  }
  func.func @transform_5(%arg0: i32) -> (i32, i32) {
    %c0_i32 = arith.constant 0 : i32
    %c0_i32_0 = arith.constant 0 : i32
    %c0_i32_1 = arith.constant 0 : i32
    return %c0_i32, %c0_i32_0 : i32, i32
  }
  func.func @transform_6(%arg0: i32) -> (i32, i32) {
    %c0_i32 = arith.constant 0 : i32
    %c0_i32_0 = arith.constant 0 : i32
    %c0_i32_1 = arith.constant 0 : i32
    return %c0_i32, %c0_i32_0 : i32, i32
  }
  func.func @transform_7(%arg0: i32) -> (i32, i32, i32) {
    %c0_i32 = arith.constant 0 : i32
    %c0_i32_0 = arith.constant 0 : i32
    %c0_i32_1 = arith.constant 0 : i32
    return %arg0, %c0_i32, %c0_i32_0 : i32, i32, i32
  }
}

</mosaic_0001>

<llo_original>
// kernel: tpu_custom_call.1
$region0: #{tpu_custom_call.1}
  #allocation0 [shape = 'u32[]', space=smem, size = 0x4, offset = 0x4, fixed_abs, tag = 'smem constant byte address 0x4 - core index']
  #allocation1 [shape = 'u32[72,128]{1,0:T(1,128)}', space=vmem, size = 0x9000, scoped, tag = 'internal scratch']
  %s0 = inlined_call_operand.vmem [shape: bf16[2,16,32], index: 0, kind: input, shape index: {}]
  %s1 = inlined_call_operand.vmem [shape: bf16[160,32], index: 1, kind: input, shape index: {}]
  %s2 = inlined_call_operand.vmem [shape: bf16[160,16], index: 2, kind: input, shape index: {}]
  %s3 = inlined_call_operand.vmem [shape: bf16[80,8], index: 3, kind: input, shape index: {}]
  %s4 = inlined_call_operand.vmem [shape: bf16[40,4], index: 4, kind: input, shape index: {}]
  %s5 = inlined_call_operand.vmem [shape: bf16[4,2], index: 5, kind: input, shape index: {}]
  %s6 = inlined_call_operand.vmem [shape: f32[1,640], index: 6, kind: input, shape index: {}]
  %s7 = inlined_call_operand.vmem [shape: f32[2,16,2], index: 7, kind: output, shape index: {}]
  %s8 = sld [smem:[#allocation0]]
  $region61: #{tpu_custom_call.1} parent=0
    _
  %s10 = ssub.s32 1, %s8
  %s11 = scalar_select 0, %s10, %s8
  loop: start=0, step=1, limit=4
  $region2: #{tpu_custom_call.1} parent=0 // loop_pre_header
    _
  $region3: #{tpu_custom_call.1} parent=0 // loop_header
    %s13 = sphi 0, %s17
    %p14 = scmp.ge.s32.totalorder %s13, 4
    %s23 = sphi 0, %s25
    %s26 = sphi 0, %s23
    %s27 = sphi 0, %s26
    %s43 = sphi 0, %s27
    %s47 = sphi 0, %s47
    %s49 = sphi 0, %s47
    %s50 = sphi 0, %s49
    %s64 = sphi 0, %s50
    %s68 = sphi 0, %s68
    %s70 = sphi 0, %s68
    %s71 = sphi 0, %s70
    %s85 = sphi 0, %s71
    %s89 = sphi 0, %s89
    %s91 = sphi 0, %s89
    %s92 = sphi 0, %s91
    %s106 = sphi 0, %s92
    %s110 = sphi 0, %s110
    %s112 = sphi 0, %s110
    %s113 = sphi 0, %s112
    %s127 = sphi 0, %s113
    %s131 = sphi 0, %s131
    %s133 = sphi 0, %s131
    %s134 = sphi 0, %s133
    %s148 = sphi 0, %s134
    %s152 = sphi 0, %s152
    %s154 = sphi 0, %s152
    %s155 = sphi 0, %s154
    %s169 = sphi 0, %s155
    %s175 = sphi 0, %s177
    %s178 = sphi 0, %s175
    %s179 = sphi 0, %s178
    %s195 = sphi 0, %s179
  $region4: #{tpu_custom_call.1} parent=0 // loop_header_branch
    %16 = sbr.rel (%p14) target = $region8
  $region5: #{tpu_custom_call.1} parent=0 // loop_body
    %s18 = ssub.s32 %s13, 1
    %s19 = ssub.s32 %s13, 2
    %s20 = sadd.s32 %s13, 1
    %s21 = ssub.s32 %s13, %s20
    %p22 = scmp.eq.s32.totalorder %s21, 0
    %s24 = sadd.s32 %s23, 1
    %s25 = scalar_select %p22, %s23, %s24
    %p28 = pneg %p22
    %p29 = scmp.eq.s32.totalorder %s13, 1
    %p30 = por %p28, %p29
    %p31 = scmp.ne.s32.totalorder %s23, %s26
    %p32 = scmp.eq.s32.totalorder %s13, 0
    %p33 = por %p31, %p32
    %p34 = scmp.ne.s32.totalorder %s23, %s26
    %p35 = scmp.eq.s32.totalorder %s18, 1
    %p36 = por %p34, %p35
    %p37 = scmp.ne.s32.totalorder %s26, %s27
    %p38 = scmp.eq.s32.totalorder %s18, 0
    %p39 = por %p37, %p38
    %p40 = scmp.ne.s32.totalorder %s26, %s27
    %p41 = scmp.eq.s32.totalorder %s19, 1
    %p42 = por %p40, %p41
    %p44 = scmp.ne.s32.totalorder %s27, %s43
    %p45 = scmp.eq.s32.totalorder %s19, 0
    %p46 = por %p44, %p45
    %s48 = sadd.s32 %s47, 1
    %p51 = scmp.eq.s32.totalorder %s13, 1
    %p52 = scmp.ne.s32.totalorder %s47, %s49
    %p53 = scmp.eq.s32.totalorder %s13, 0
    %p54 = por %p52, %p53
    %p55 = scmp.ne.s32.totalorder %s47, %s49
    %p56 = scmp.eq.s32.totalorder %s18, 1
    %p57 = por %p55, %p56
    %p58 = scmp.ne.s32.totalorder %s49, %s50
    %p59 = scmp.eq.s32.totalorder %s18, 0
    %p60 = por %p58, %p59
    %p61 = scmp.ne.s32.totalorder %s49, %s50
    %p62 = scmp.eq.s32.totalorder %s19, 1
    %p63 = por %p61, %p62
    %p65 = scmp.ne.s32.totalorder %s50, %s64
    %p66 = scmp.eq.s32.totalorder %s19, 0
    %p67 = por %p65, %p66
    %s69 = sadd.s32 %s68, 1
    %p72 = scmp.eq.s32.totalorder %s13, 1
    %p73 = scmp.ne.s32.totalorder %s68, %s70
    %p74 = scmp.eq.s32.totalorder %s13, 0
    %p75 = por %p73, %p74
    %p76 = scmp.ne.s32.totalorder %s68, %s70
    %p77 = scmp.eq.s32.totalorder %s18, 1
    %p78 = por %p76, %p77
    %p79 = scmp.ne.s32.totalorder %s70, %s71
    %p80 = scmp.eq.s32.totalorder %s18, 0
    %p81 = por %p79, %p80
    %p82 = scmp.ne.s32.totalorder %s70, %s71
    %p83 = scmp.eq.s32.totalorder %s19, 1
    %p84 = por %p82, %p83
    %p86 = scmp.ne.s32.totalorder %s71, %s85
    %p87 = scmp.eq.s32.totalorder %s19, 0
    %p88 = por %p86, %p87
    %s90 = sadd.s32 %s89, 1
    %p93 = scmp.eq.s32.totalorder %s13, 1
    %p94 = scmp.ne.s32.totalorder %s89, %s91
    %p95 = scmp.eq.s32.totalorder %s13, 0
    %p96 = por %p94, %p95
    %p97 = scmp.ne.s32.totalorder %s89, %s91
    %p98 = scmp.eq.s32.totalorder %s18, 1
    %p99 = por %p97, %p98
    %p100 = scmp.ne.s32.totalorder %s91, %s92
    %p101 = scmp.eq.s32.totalorder %s18, 0
    %p102 = por %p100, %p101
    %p103 = scmp.ne.s32.totalorder %s91, %s92
    %p104 = scmp.eq.s32.totalorder %s19, 1
    %p105 = por %p103, %p104
    %p107 = scmp.ne.s32.totalorder %s92, %s106
    %p108 = scmp.eq.s32.totalorder %s19, 0
    %p109 = por %p107, %p108
    %s111 = sadd.s32 %s110, 1
    %p114 = scmp.eq.s32.totalorder %s13, 1
    %p115 = scmp.ne.s32.totalorder %s110, %s112
    %p116 = scmp.eq.s32.totalorder %s13, 0
    %p117 = por %p115, %p116
    %p118 = scmp.ne.s32.totalorder %s110, %s112
    %p119 = scmp.eq.s32.totalorder %s18, 1
    %p120 = por %p118, %p119
    %p121 = scmp.ne.s32.totalorder %s112, %s113
    %p122 = scmp.eq.s32.totalorder %s18, 0
    %p123 = por %p121, %p122
    %p124 = scmp.ne.s32.totalorder %s112, %s113
    %p125 = scmp.eq.s32.totalorder %s19, 1
    %p126 = por %p124, %p125
    %p128 = scmp.ne.s32.totalorder %s113, %s127
    %p129 = scmp.eq.s32.totalorder %s19, 0
    %p130 = por %p128, %p129
    %s132 = sadd.s32 %s131, 1
    %p135 = scmp.eq.s32.totalorder %s13, 1
    %p136 = scmp.ne.s32.totalorder %s131, %s133
    %p137 = scmp.eq.s32.totalorder %s13, 0
    %p138 = por %p136, %p137
    %p139 = scmp.ne.s32.totalorder %s131, %s133
    %p140 = scmp.eq.s32.totalorder %s18, 1
    %p141 = por %p139, %p140
    %p142 = scmp.ne.s32.totalorder %s133, %s134
    %p143 = scmp.eq.s32.totalorder %s18, 0
    %p144 = por %p142, %p143
    %p145 = scmp.ne.s32.totalorder %s133, %s134
    %p146 = scmp.eq.s32.totalorder %s19, 1
    %p147 = por %p145, %p146
    %p149 = scmp.ne.s32.totalorder %s134, %s148
    %p150 = scmp.eq.s32.totalorder %s19, 0
    %p151 = por %p149, %p150
    %s153 = sadd.s32 %s152, 1
    %p156 = scmp.eq.s32.totalorder %s13, 1
    %p157 = scmp.ne.s32.totalorder %s152, %s154
    %p158 = scmp.eq.s32.totalorder %s13, 0
    %p159 = por %p157, %p158
    %p160 = scmp.ne.s32.totalorder %s152, %s154
    %p161 = scmp.eq.s32.totalorder %s18, 1
    %p162 = por %p160, %p161
    %p163 = scmp.ne.s32.totalorder %s154, %s155
    %p164 = scmp.eq.s32.totalorder %s18, 0
    %p165 = por %p163, %p164
    %p166 = scmp.ne.s32.totalorder %s154, %s155
    %p167 = scmp.eq.s32.totalorder %s19, 1
    %p168 = por %p166, %p167
    %p170 = scmp.ne.s32.totalorder %s155, %s169
    %p171 = scmp.eq.s32.totalorder %s19, 0
    %p172 = por %p170, %p171
    %s173 = ssub.s32 %s13, %s20
    %p174 = scmp.eq.s32.totalorder %s173, 0
    %s176 = sadd.s32 %s175, 1
    %s177 = scalar_select %p174, %s175, %s176
    %p180 = pneg %p174
    %p181 = scmp.eq.s32.totalorder %s13, 1
    %p182 = por %p180, %p181
    %p183 = scmp.ne.s32.totalorder %s175, %s178
    %p184 = scmp.eq.s32.totalorder %s13, 0
    %p185 = por %p183, %p184
    %p186 = scmp.ne.s32.totalorder %s175, %s178
    %p187 = scmp.eq.s32.totalorder %s18, 1
    %p188 = por %p186, %p187
    %p189 = scmp.ne.s32.totalorder %s178, %s179
    %p190 = scmp.eq.s32.totalorder %s18, 0
    %p191 = por %p189, %p190
    %p192 = scmp.ne.s32.totalorder %s178, %s179
    %p193 = scmp.eq.s32.totalorder %s19, 1
    %p194 = por %p192, %p193
    %p196 = scmp.ne.s32.totalorder %s179, %s195
    %p197 = scmp.eq.s32.totalorder %s19, 0
    %p198 = por %p196, %p197
    %p199 = scmp.le.s32.totalorder 1, %s13
    %p200 = scmp.lt.s32.totalorder %s13, 3
    %p201 = pnand %p199, %p200
    %p202 = pneg %p201
    // Predicated region
    $region9: #{tpu_custom_call.1} parent=5 // pred_check
      _
    $region10: #{tpu_custom_call.1} parent=5 // pred_check_branch
      %204 = sbr.rel (%p201) target = $region12
    $region11: #{tpu_custom_call.1} parent=5 // pred_region
      %s205 = ssub.s32 %s13, 1
      // Predicated region
      $region13: #{tpu_custom_call.1} parent=11 // pred_check
        %p206 = pneg %p60
      $region14: #{tpu_custom_call.1} parent=11 // pred_check_branch
        %208 = sbr.rel (%p206) target = $region16
      $region15: #{tpu_custom_call.1} parent=11 // pred_region
        _
      $region16: #{tpu_custom_call.1} parent=11 // pred_fallthru
        _
      // Predicated region
      $region17: #{tpu_custom_call.1} parent=11 // pred_check
        %p209 = pneg %p81
      $region18: #{tpu_custom_call.1} parent=11 // pred_check_branch
        %211 = sbr.rel (%p209) target = $region20
      $region19: #{tpu_custom_call.1} parent=11 // pred_region
        _
      $region20: #{tpu_custom_call.1} parent=11 // pred_fallthru
        _
      // Predicated region
      $region21: #{tpu_custom_call.1} parent=11 // pred_check
        %p212 = pneg %p102
      $region22: #{tpu_custom_call.1} parent=11 // pred_check_branch
        %214 = sbr.rel (%p212) target = $region24
      $region23: #{tpu_custom_call.1} parent=11 // pred_region
        _
      $region24: #{tpu_custom_call.1} parent=11 // pred_fallthru
        _
      // Predicated region
      $region25: #{tpu_custom_call.1} parent=11 // pred_check
        %p215 = pneg %p123
      $region26: #{tpu_custom_call.1} parent=11 // pred_check_branch
        %217 = sbr.rel (%p215) target = $region28
      $region27: #{tpu_custom_call.1} parent=11 // pred_region
        _
      $region28: #{tpu_custom_call.1} parent=11 // pred_fallthru
        _
      // Predicated region
      $region29: #{tpu_custom_call.1} parent=11 // pred_check
        %p218 = pneg %p144
      $region30: #{tpu_custom_call.1} parent=11 // pred_check_branch
        %220 = sbr.rel (%p218) target = $region32
      $region31: #{tpu_custom_call.1} parent=11 // pred_region
        _
      $region32: #{tpu_custom_call.1} parent=11 // pred_fallthru
        _
      // Predicated region
      $region33: #{tpu_custom_call.1} parent=11 // pred_check
        %p221 = pneg %p165
      $region34: #{tpu_custom_call.1} parent=11 // pred_check_branch
        %223 = sbr.rel (%p221) target = $region36
      $region35: #{tpu_custom_call.1} parent=11 // pred_region
        _
      $region36: #{tpu_custom_call.1} parent=11 // pred_fallthru
        _
    $region12: #{tpu_custom_call.1} parent=5 // pred_fallthru
      _
    %p224 = scmp.lt.s32.totalorder %s13, 2
    // Predicated region
    $region37: #{tpu_custom_call.1} parent=5 // pred_check
      %p225 = pneg %p224
    $region38: #{tpu_custom_call.1} parent=5 // pred_check_branch
      %227 = sbr.rel (%p225) target = $region40
    $region39: #{tpu_custom_call.1} parent=5 // pred_region
      // Predicated region
      $region41: #{tpu_custom_call.1} parent=39 // pred_check
        %p228 = pneg %p33
      $region42: #{tpu_custom_call.1} parent=39 // pred_check_branch
        %230 = sbr.rel (%p228) target = $region44
      $region43: #{tpu_custom_call.1} parent=39 // pred_region
        %p231 = scmp.lt.s32.totalorder %s13, 1
        %s232 = scalar_select %p231, %s13, 1
        %s233 = smul.addr %s232, 2
        %s234 = smul.addr %s233, 4
        %s235 = scalar_lea.vmem %s0, %s234
      $region44: #{tpu_custom_call.1} parent=39 // pred_fallthru
        _
    $region40: #{tpu_custom_call.1} parent=5 // pred_fallthru
      _
    %p236 = scmp.le.s32.totalorder 1, %s13
    %p237 = scmp.lt.s32.totalorder %s13, 3
    %p238 = pnand %p236, %p237
    %p239 = pneg %p238
    // Predicated region
    $region45: #{tpu_custom_call.1} parent=5 // pred_check
      _
    $region46: #{tpu_custom_call.1} parent=5 // pred_check_branch
      %241 = sbr.rel (%p238) target = $region48
    $region47: #{tpu_custom_call.1} parent=5 // pred_region
      %s242 = ssub.s32 %s13, 1
      %p243 = scmp.lt.s32.totalorder %s18, 1
      %s244 = scalar_select %p243, %s18, 1
      %s245 = smul.addr %s244, 2
      %s246 = smul.addr %s245, 4
      %s247 = scalar_lea.vmem %s0, %s246
      %p248 = pneg %p39
      %p249 = pneg %p36
      %p250 = pneg %p60
      %p251 = pneg %p57
      %p252 = pneg %p81
      %p253 = pneg %p78
      %p254 = pneg %p102
      %p255 = pneg %p99
      %p256 = pneg %p123
      %p257 = pneg %p120
      %p258 = pneg %p144
      %p259 = pneg %p141
      %p260 = pneg %p165
      %p261 = pneg %p162
      %p262 = pneg %p191
      %p263 = pneg %p188
      %p264 = scmp.lt.s32.totalorder %s18, 1
      %s265 = scalar_select %p264, %s18, 1
      %s266 = smul.addr %s265, 2
      %s267 = smul.addr %s266, 8
      %s268 = scalar_lea.vmem %s7, %s267
      %p269 = scmp.lt.s32.totalorder %s18, 1
      %s270 = scalar_select %p269, %s18, 1
      %s271 = smul.addr %s270, 2
      %s272 = smul.addr %s271, 4
      %s273 = scalar_lea.vmem %s0, %s272
      %p274 = scmp.lt.s32.totalorder %s18, 1
      %s275 = scalar_select %p274, %s18, 1
      %s276 = smul.addr %s275, 2
      %s277 = smul.addr %s276, 8
      %s278 = scalar_lea.vmem %s7, %s277
      %v282 = vlaneseq
      %v283 = vshrl.u32 %v282, 7
      %v284 = vadd.s32 %v283, 8
      %vm285 = vcmp.lt.s32.totalorder %v283, 0
      %v286 = vsub.s32 0, %v283
      %v287 = vsel %vm285, %v286, %v283
      %v288 = vshrl.u32 %v287, 4
      %v289 = vand.u32 %v287, 15
      %v290 = vsub.s32 0, %v289
      %v291 = vsel %vm285, %v290, %v289
      %vm292 = vcmp.lt.s32.totalorder %v284, 0
      %v293 = vsub.s32 0, %v284
      %v294 = vsel %vm292, %v293, %v284
      %v295 = vshrl.u32 %v294, 4
      %v296 = vand.u32 %v294, 15
      %v297 = vsub.s32 0, %v296
      %v298 = vsel %vm292, %v297, %v296
      %vm299 = vcmp.ne.s32.totalorder %v291, 0
      %vm300 = vcmp.ne.s32.totalorder %v298, 0
      %vm301 = vcmp.lt.s32.totalorder %v291, 0
      %vm302 = vcmp.lt.s32.totalorder %v298, 0
      %vm303 = vmand %vm301, %vm299
      %vm304 = vmand %vm302, %vm300
      %v305 = vadd.s32 %v291, 16
      %v306 = vadd.s32 %v298, 16
      %v307 = vsel %vm303, %v305, %v291
      %v308 = vsel %vm304, %v306, %v298
      %vm309 = vcmp.ge.s32.totalorder %v307, 2
      %vm310 = vcmp.ge.s32.totalorder %v308, 2
      %vm311 = vcmp.ge.s32.totalorder %v307, 1
      %vm312 = vcmp.ge.s32.totalorder %v308, 1
      %vm313 = vcmp.lt.s32.totalorder %v307, 15
      %vm314 = vcmp.lt.s32.totalorder %v308, 15
      %vm315 = vcmp.lt.s32.totalorder %v307, 14
      %vm316 = vcmp.lt.s32.totalorder %v308, 14
      %v317 = vld [vmem:[%s273] sm:$0xf]
      %v318 = vld [vmem:[%s273 + $0x4] sm:$0xf]
      %v321 = vunpack.c.l.b16 %v317
      %v322 = vunpack.c.l.b16 %v318
      %v323 = vpack.c.b16 %v322, %v321
      %v324 = vrot.slane %v323, 7
      %vm325 = vcmask 1040384
      %v328 = vsel %vm325, 0, %v324
      %v330 = vsel %vm309, 1, 0
      %v331 = vsel %vm310, 1, 0
      %vm332 = vcmp.eq.s32.totalorder %v330, 1
      %vm333 = vcmp.eq.s32.totalorder %v331, 1
      %vm334 = vmpackc.low %vm332, %vm332
      %vm335 = vmpackc.low %vm333, %vm333
      %v336 = vsel %vm334, 65537, 0
      %v337 = vsel %vm335, 65537, 0
      %v338 = vunpack.c.l.b16 %v336
      %v339 = vunpack.c.l.b16 %v337
      %v340 = vpack.c.b16 %v339, %v338
      %v341 = vunpack.c.l.b16 %v340
      %v342 = vunpack.c.h.b16 %v340
      %v343 = vunpack.c.l.b16 0
      %v344 = vunpack.c.h.b16 0
      %vm345 = vcmp.ne.s32.totalorder %v341, %v343
      %vm346 = vcmp.ne.s32.totalorder %v342, %v344
      %vm347 = vmpackc.low %vm346, %vm345
      %v348 = vsel %vm347, %v328, 0
      %v350 = vshrl.u32 %v323, 16
      %v352 = vrot.slane %v350, 7
      %v353 = vshll.u32 %v323, 16
      %v355 = vor.u32 %v352, %v353
      %vm357 = vcmask 1040384
      %vm358 = vsmask.f32 256
      %vm359 = vmand %vm357, %vm358
      %v360 = vsel %vm359, 0, %v355
      %v361 = vsel %vm311, 1, 0
      %v362 = vsel %vm312, 1, 0
      %vm363 = vcmp.eq.s32.totalorder %v361, 1
      %vm364 = vcmp.eq.s32.totalorder %v362, 1
      %vm365 = vmpackc.low %vm363, %vm363
      %vm366 = vmpackc.low %vm364, %vm364
      %v367 = vsel %vm365, 65537, 0
      %v368 = vsel %vm366, 65537, 0
      %v369 = vunpack.c.l.b16 %v367
      %v370 = vunpack.c.l.b16 %v368
      %v371 = vpack.c.b16 %v370, %v369
      %v372 = vunpack.c.l.b16 %v371
      %v373 = vunpack.c.h.b16 %v371
      %v374 = vunpack.c.l.b16 0
      %v375 = vunpack.c.h.b16 0
      %vm376 = vcmp.ne.s32.totalorder %v372, %v374
      %vm377 = vcmp.ne.s32.totalorder %v373, %v375
      %vm378 = vmpackc.low %vm377, %vm376
      %v379 = vsel %vm378, %v360, 0
      %v380 = vrot.slane %v353, 1
      %v381 = vor.u32 %v350, %v380
      %vm383 = vcmask 1047552
      %vm384 = vsmask.f32 7424
      %vm385 = vmand %vm383, %vm384
      %v386 = vsel %vm385, %v381, 0
      %v387 = vsel %vm313, 1, 0
      %v388 = vsel %vm314, 1, 0
      %vm389 = vcmp.eq.s32.totalorder %v387, 1
      %vm390 = vcmp.eq.s32.totalorder %v388, 1
      %vm391 = vmpackc.low %vm389, %vm389
      %vm392 = vmpackc.low %vm390, %vm390
      %v393 = vsel %vm391, 65537, 0
      %v394 = vsel %vm392, 65537, 0
      %v395 = vunpack.c.l.b16 %v393
      %v396 = vunpack.c.l.b16 %v394
      %v397 = vpack.c.b16 %v396, %v395
      %v398 = vunpack.c.l.b16 %v397
      %v399 = vunpack.c.h.b16 %v397
      %v400 = vunpack.c.l.b16 0
      %v401 = vunpack.c.h.b16 0
      %vm402 = vcmp.ne.s32.totalorder %v398, %v400
      %vm403 = vcmp.ne.s32.totalorder %v399, %v401
      %vm404 = vmpackc.low %vm403, %vm402
      %v405 = vsel %vm404, %v386, 0
      %v406 = vrot.slane %v323, 1
      %vm407 = vcmask 1046528
      %v409 = vsel %vm407, %v406, 0
      %v411 = vsel %vm315, 1, 0
      %v412 = vsel %vm316, 1, 0
      %vm413 = vcmp.eq.s32.totalorder %v411, 1
      %vm414 = vcmp.eq.s32.totalorder %v412, 1
      %vm415 = vmpackc.low %vm413, %vm413
      %vm416 = vmpackc.low %vm414, %vm414
      %v417 = vsel %vm415, 65537, 0
      %v418 = vsel %vm416, 65537, 0
      %v419 = vunpack.c.l.b16 %v417
      %v420 = vunpack.c.l.b16 %v418
      %v421 = vpack.c.b16 %v420, %v419
      %v422 = vunpack.c.l.b16 %v421
      %v423 = vunpack.c.h.b16 %v421
      %v424 = vunpack.c.l.b16 0
      %v425 = vunpack.c.h.b16 0
      %vm426 = vcmp.ne.s32.totalorder %v422, %v424
      %vm427 = vcmp.ne.s32.totalorder %v423, %v425
      %vm428 = vmpackc.low %vm427, %vm426
      %v429 = vsel %vm428, %v409, 0
      %431 = vrot.lane.b32.xlu0 %v379, 32
      %v432 = vpop.permute.xlu0 %431
      %433 = vrot.lane.b32.xlu0 %v323, 64
      %v434 = vpop.permute.xlu0 %433
      %436 = vrot.lane.b32.xlu0 %v405, 96
      %v437 = vpop.permute.xlu0 %436
      %vm438 = vcmask 261120
      %v441 = vsel %vm438, %v348, %v432
      %vm442 = vcmask 523264
      %v444 = vsel %vm442, %v441, %v434
      %vm445 = vcmask 785408
      %v447 = vsel %vm445, %v444, %v437
      %v449 = vld [vmem:[%s1] sm:$0xf]
      %v450 = vld [vmem:[%s1 + $0x4] sm:$0xf]
      %v451 = vld [vmem:[%s1 + $0x8] sm:$0xf]
      %v452 = vld [vmem:[%s1 + $0xc] sm:$0xf]
      %v453 = vld [vmem:[%s1 + $0x10] sm:$0xf]
      %v454 = vld [vmem:[%s1 + $0x14] sm:$0xf]
      %v455 = vld [vmem:[%s1 + $0x18] sm:$0xf]
      %v456 = vld [vmem:[%s1 + $0x1c] sm:$0xf]
      %v457 = vld [vmem:[%s1 + $0x20] sm:$0xf]
      %v458 = vld [vmem:[%s1 + $0x24] sm:$0xf]
      %v459 = vld [vmem:[%s1 + $0x28] sm:$0xf]
      %v460 = vld [vmem:[%s1 + $0x2c] sm:$0xf]
      %v461 = vld [vmem:[%s1 + $0x30] sm:$0xf]
      %v462 = vld [vmem:[%s1 + $0x34] sm:$0xf]
      %v463 = vld [vmem:[%s1 + $0x38] sm:$0xf]
      %v464 = vld [vmem:[%s1 + $0x3c] sm:$0xf]
      %v465 = vld [vmem:[%s1 + $0x40] sm:$0xf]
      %v466 = vld [vmem:[%s1 + $0x44] sm:$0xf]
      %v467 = vld [vmem:[%s1 + $0x48] sm:$0xf]
      %v468 = vld [vmem:[%s1 + $0x4c] sm:$0xf]
      %v469 = vld [vmem:[%s6] sm:$0x1]
      %v471 = vperm.slane %v469, 0
      %v493 = vunpack.c.l.b16 %v449
      %v494 = vunpack.c.l.b16 %v450
      %v495 = vunpack.c.l.b16 %v451
      %v496 = vunpack.c.l.b16 %v452
      %v497 = vunpack.c.l.b16 %v453
      %v498 = vunpack.c.l.b16 %v454
      %v499 = vunpack.c.l.b16 %v455
      %v500 = vunpack.c.l.b16 %v456
      %v501 = vunpack.c.l.b16 %v457
      %v502 = vunpack.c.l.b16 %v458
      %v503 = vunpack.c.l.b16 %v459
      %v504 = vunpack.c.l.b16 %v460
      %v505 = vunpack.c.l.b16 %v461
      %v506 = vunpack.c.l.b16 %v462
      %v507 = vunpack.c.l.b16 %v463
      %v508 = vunpack.c.l.b16 %v464
      %v509 = vunpack.c.l.b16 %v465
      %v510 = vunpack.c.l.b16 %v466
      %v511 = vunpack.c.l.b16 %v467
      %v512 = vunpack.c.l.b16 %v468
      %v513 = vpack.c.b16 %v494, %v493
      %v514 = vpack.c.b16 %v496, %v495
      %v515 = vpack.c.b16 %v498, %v497
      %v516 = vpack.c.b16 %v500, %v499
      %v517 = vpack.c.b16 %v502, %v501
      %v518 = vpack.c.b16 %v504, %v503
      %v519 = vpack.c.b16 %v506, %v505
      %v520 = vpack.c.b16 %v508, %v507
      %v521 = vpack.c.b16 %v510, %v509
      %v522 = vpack.c.b16 %v512, %v511
      %v534 = vsel %vm438, %v429, 0
      %536 = vmatpush.bf16.msra.mxu0 %v520
      %537 = vmatpush.bf16.msra.mxu0 %v519
      %538 = vmatpush.bf16.msra.mxu0 %v518
      %539 = vmatpush.bf16.msra.mxu0 %v517
      %540 = vmatpush.bf16.msra.mxu0 %v516
      %541 = vmatpush.bf16.msra.mxu0 %v515
      %542 = vmatpush.bf16.msra.mxu0 %v514
      %543 = vmatpush.bf16.msra.mxu0 %v513
      %544 = vmatmul.bf16.gmra.mxu0 %v447
      %v545 = vpop.f32.mrf.mxu0
      %v546 = vadd.f32 %v471, %v545
      %v547 = vpop.f32.mrf.mxu0
      %v548 = vadd.f32 %v471, %v547
      %549 = vdwg.mxu0
      %550 = vmatpush.bf16.msra.mxu0 0
      %551 = vmatpush.bf16.msra.mxu0 0
      %552 = vmatpush.bf16.msra.mxu0 0
      %553 = vmatpush.bf16.msra.mxu0 0
      %554 = vmatpush.bf16.msra.mxu0 0
      %555 = vmatpush.bf16.msra.mxu0 0
      %556 = vmatpush.bf16.msra.mxu0 %v522
      %557 = vmatpush.bf16.msra.mxu0 %v521
      %558 = vmatmul.bf16.gmra.mxu0 %v534
      %v559 = vpop.f32.mrf.mxu0
      %v560 = vadd.f32 %v546, %v559
      %v561 = vpop.f32.mrf.mxu0
      %v562 = vadd.f32 %v548, %v561
      %563 = vdwg.mxu0
      %vm564 = vcmp.ge.f32.partialorder %v560, 0.0
      %vm565 = vcmp.ge.f32.partialorder %v562, 0.0
      %v566 = vmul.f32 %v560, 0.01
      %v567 = vmul.f32 %v562, 0.01
      %v568 = vsel %vm564, %v560, %v566
      %v569 = vsel %vm565, %v562, %v567
      %v570 = vpack.c.bf16 %v568, %v568
      %v571 = vpack.c.bf16 %v569, %v569
      %v574 = vunpack.c.l.b16 %v570
      %v575 = vunpack.c.l.b16 %v571
      %v576 = vpack.c.b16 %v575, %v574
      %v577 = vrot.slane %v576, 7
      %v579 = vsel %vm325, 0, %v577
      %v581 = vsel %vm347, %v579, 0
      %v583 = vshrl.u32 %v576, 16
      %v585 = vrot.slane %v583, 7
      %v586 = vshll.u32 %v576, 16
      %v588 = vor.u32 %v585, %v586
      %v590 = vsel %vm359, 0, %v588
      %v591 = vsel %vm378, %v590, 0
      %v592 = vrot.slane %v586, 1
      %v593 = vor.u32 %v583, %v592
      %v595 = vsel %vm385, %v593, 0
      %v596 = vsel %vm404, %v595, 0
      %v597 = vrot.slane %v576, 1
      %v599 = vsel %vm407, %v597, 0
      %v601 = vsel %vm428, %v599, 0
      %603 = vrot.lane.b32.xlu0 %v591, 32
      %v604 = vpop.permute.xlu0 %603
      %605 = vrot.lane.b32.xlu0 %v576, 64
      %v606 = vpop.permute.xlu0 %605
      %608 = vrot.lane.b32.xlu0 %v596, 96
      %v609 = vpop.permute.xlu0 %608
      %v612 = vsel %vm438, %v581, %v604
      %v614 = vsel %vm442, %v612, %v606
      %v616 = vsel %vm445, %v614, %v609
      %v618 = vld [vmem:[%s2] sm:$0xf]
      %v619 = vld [vmem:[%s2 + $0x4] sm:$0xf]
      %v620 = vld [vmem:[%s2 + $0x8] sm:$0xf]
      %v621 = vld [vmem:[%s2 + $0xc] sm:$0xf]
      %v622 = vld [vmem:[%s2 + $0x10] sm:$0xf]
      %v623 = vld [vmem:[%s2 + $0x14] sm:$0xf]
      %v624 = vld [vmem:[%s2 + $0x18] sm:$0xf]
      %v625 = vld [vmem:[%s2 + $0x1c] sm:$0xf]
      %v626 = vld [vmem:[%s2 + $0x20] sm:$0xf]
      %v627 = vld [vmem:[%s2 + $0x24] sm:$0xf]
      %v628 = vld [vmem:[%s2 + $0x28] sm:$0xf]
      %v629 = vld [vmem:[%s2 + $0x2c] sm:$0xf]
      %v630 = vld [vmem:[%s2 + $0x30] sm:$0xf]
      %v631 = vld [vmem:[%s2 + $0x34] sm:$0xf]
      %v632 = vld [vmem:[%s2 + $0x38] sm:$0xf]
      %v633 = vld [vmem:[%s2 + $0x3c] sm:$0xf]
      %v634 = vld [vmem:[%s2 + $0x40] sm:$0xf]
      %v635 = vld [vmem:[%s2 + $0x44] sm:$0xf]
      %v636 = vld [vmem:[%s2 + $0x48] sm:$0xf]
      %v637 = vld [vmem:[%s2 + $0x4c] sm:$0xf]
      %v638 = vld [vmem:[%s6 + $0x1] sm:$0x1]
      %v640 = vperm.slane %v638, 0
      %v662 = vunpack.c.l.b16 %v618
      %v663 = vunpack.c.l.b16 %v619
      %v664 = vunpack.c.l.b16 %v620
      %v665 = vunpack.c.l.b16 %v621
      %v666 = vunpack.c.l.b16 %v622
      %v667 = vunpack.c.l.b16 %v623
      %v668 = vunpack.c.l.b16 %v624
      %v669 = vunpack.c.l.b16 %v625
      %v670 = vunpack.c.l.b16 %v626
      %v671 = vunpack.c.l.b16 %v627
      %v672 = vunpack.c.l.b16 %v628
      %v673 = vunpack.c.l.b16 %v629
      %v674 = vunpack.c.l.b16 %v630
      %v675 = vunpack.c.l.b16 %v631
      %v676 = vunpack.c.l.b16 %v632
      %v677 = vunpack.c.l.b16 %v633
      %v678 = vunpack.c.l.b16 %v634
      %v679 = vunpack.c.l.b16 %v635
      %v680 = vunpack.c.l.b16 %v636
      %v681 = vunpack.c.l.b16 %v637
      %v682 = vpack.c.b16 %v663, %v662
      %v683 = vpack.c.b16 %v665, %v664
      %v684 = vpack.c.b16 %v667, %v666
      %v685 = vpack.c.b16 %v669, %v668
      %v686 = vpack.c.b16 %v671, %v670
      %v687 = vpack.c.b16 %v673, %v672
      %v688 = vpack.c.b16 %v675, %v674
      %v689 = vpack.c.b16 %v677, %v676
      %v690 = vpack.c.b16 %v679, %v678
      %v691 = vpack.c.b16 %v681, %v680
      %v703 = vsel %vm438, %v601, 0
      %705 = vmatpush.bf16.msra.mxu0 %v689
      %706 = vmatpush.bf16.msra.mxu0 %v688
      %707 = vmatpush.bf16.msra.mxu0 %v687
      %708 = vmatpush.bf16.msra.mxu0 %v686
      %709 = vmatpush.bf16.msra.mxu0 %v685
      %710 = vmatpush.bf16.msra.mxu0 %v684
      %711 = vmatpush.bf16.msra.mxu0 %v683
      %712 = vmatpush.bf16.msra.mxu0 %v682
      %713 = vmatmul.bf16.gmra.mxu0 %v616
      %v714 = vpop.f32.mrf.mxu0
      %v715 = vadd.f32 %v640, %v714
      %v716 = vpop.f32.mrf.mxu0
      %v717 = vadd.f32 %v640, %v716
      %718 = vdwg.mxu0
      %719 = vmatpush.bf16.msra.mxu0 0
      %720 = vmatpush.bf16.msra.mxu0 0
      %721 = vmatpush.bf16.msra.mxu0 0
      %722 = vmatpush.bf16.msra.mxu0 0
      %723 = vmatpush.bf16.msra.mxu0 0
      %724 = vmatpush.bf16.msra.mxu0 0
      %725 = vmatpush.bf16.msra.mxu0 %v691
      %726 = vmatpush.bf16.msra.mxu0 %v690
      %727 = vmatmul.bf16.gmra.mxu0 %v703
      %v728 = vpop.f32.mrf.mxu0
      %v729 = vadd.f32 %v715, %v728
      %v730 = vpop.f32.mrf.mxu0
      %v731 = vadd.f32 %v717, %v730
      %732 = vdwg.mxu0
      %vm733 = vcmp.ge.f32.partialorder %v729, 0.0
      %vm734 = vcmp.ge.f32.partialorder %v731, 0.0
      %v735 = vmul.f32 %v729, 0.01
      %v736 = vmul.f32 %v731, 0.01
      %v737 = vsel %vm733, %v729, %v735
      %v738 = vsel %vm734, %v731, %v736
      %v739 = vpack.c.bf16 %v737, %v737
      %v740 = vpack.c.bf16 %v738, %v738
      %v743 = vunpack.c.l.b16 %v739
      %v744 = vunpack.c.l.b16 %v740
      %v745 = vpack.c.b16 %v744, %v743
      %v746 = vrot.slane %v745, 7
      %v748 = vsel %vm325, 0, %v746
      %v750 = vsel %vm347, %v748, 0
      %v752 = vshrl.u32 %v745, 16
      %v754 = vrot.slane %v752, 7
      %v755 = vshll.u32 %v745, 16
      %v757 = vor.u32 %v754, %v755
      %v759 = vsel %vm359, 0, %v757
      %v760 = vsel %vm378, %v759, 0
      %v761 = vrot.slane %v755, 1
      %v762 = vor.u32 %v752, %v761
      %v764 = vsel %vm385, %v762, 0
      %v765 = vsel %vm404, %v764, 0
      %v766 = vrot.slane %v745, 1
      %v768 = vsel %vm407, %v766, 0
      %v770 = vsel %vm428, %v768, 0
      %772 = vrot.lane.b32.xlu0 %v760, 16
      %v773 = vpop.permute.xlu0 %772
      %774 = vrot.lane.b32.xlu0 %v745, 32
      %v775 = vpop.permute.xlu0 %774
      %777 = vrot.lane.b32.xlu0 %v765, 48
      %v778 = vpop.permute.xlu0 %777
      %780 = vrot.lane.b32.xlu0 %v770, 64
      %v781 = vpop.permute.xlu0 %780
      %vm782 = vcmask 130048
      %v785 = vsel %vm782, %v750, %v773
      %v787 = vsel %vm438, %v785, %v775
      %vm788 = vcmask 392192
      %v790 = vsel %vm788, %v787, %v778
      %v792 = vsel %vm442, %v790, %v781
      %v793 = vld [vmem:[%s3] sm:$0xf]
      %v794 = vld [vmem:[%s3 + $0x4] sm:$0xf]
      %v795 = vld [vmem:[%s3 + $0x8] sm:$0xf]
      %v796 = vld [vmem:[%s3 + $0xc] sm:$0xf]
      %v797 = vld [vmem:[%s3 + $0x10] sm:$0xf]
      %v798 = vld [vmem:[%s3 + $0x14] sm:$0xf]
      %v799 = vld [vmem:[%s3 + $0x18] sm:$0xf]
      %v800 = vld [vmem:[%s3 + $0x1c] sm:$0xf]
      %v801 = vld [vmem:[%s3 + $0x20] sm:$0xf]
      %v802 = vld [vmem:[%s3 + $0x24] sm:$0xf]
      %v803 = vld [vmem:[%s6 + $0x2] sm:$0x1]
      %v805 = vperm.slane %v803, 0
      %v817 = vunpack.c.l.b16 %v793
      %v818 = vunpack.c.l.b16 %v794
      %v819 = vunpack.c.l.b16 %v795
      %v820 = vunpack.c.l.b16 %v796
      %v821 = vunpack.c.l.b16 %v797
      %v822 = vunpack.c.l.b16 %v798
      %v823 = vunpack.c.l.b16 %v799
      %v824 = vunpack.c.l.b16 %v800
      %v825 = vunpack.c.l.b16 %v801
      %v826 = vunpack.c.l.b16 %v802
      %v827 = vpack.c.b16 %v818, %v817
      %v828 = vpack.c.b16 %v820, %v819
      %v829 = vpack.c.b16 %v822, %v821
      %v830 = vpack.c.b16 %v824, %v823
      %v831 = vpack.c.b16 %v826, %v825
      %vm837 = vcmask 654336
      %v838 = vsel %vm837, %v792, 0
      %840 = vmatpush.bf16.msra.mxu0 0
      %841 = vmatpush.bf16.msra.mxu0 0
      %842 = vmatpush.bf16.msra.mxu0 0
      %843 = vmatpush.bf16.msra.mxu0 %v831
      %844 = vmatpush.bf16.msra.mxu0 %v830
      %845 = vmatpush.bf16.msra.mxu0 %v829
      %846 = vmatpush.bf16.msra.mxu0 %v828
      %847 = vmatpush.bf16.msra.mxu0 %v827
      %848 = vmatmul.bf16.gmra.mxu0 %v838
      %v849 = vpop.f32.mrf.mxu0
      %v850 = vadd.f32 %v805, %v849
      %v851 = vpop.f32.mrf.mxu0
      %v852 = vadd.f32 %v805, %v851
      %853 = vdwg.mxu0
      %vm854 = vcmp.ge.f32.partialorder %v850, 0.0
      %vm855 = vcmp.ge.f32.partialorder %v852, 0.0
      %v856 = vmul.f32 %v850, 0.01
      %v857 = vmul.f32 %v852, 0.01
      %v858 = vsel %vm854, %v850, %v856
      %v859 = vsel %vm855, %v852, %v857
      %v860 = vpack.c.bf16 %v858, %v858
      %v861 = vpack.c.bf16 %v859, %v859
      %v864 = vunpack.c.l.b16 %v860
      %v865 = vunpack.c.l.b16 %v861
      %v866 = vpack.c.b16 %v865, %v864
      %v867 = vrot.slane %v866, 7
      %v869 = vsel %vm325, 0, %v867
      %v871 = vsel %vm347, %v869, 0
      %v873 = vshrl.u32 %v866, 16
      %v875 = vrot.slane %v873, 7
      %v876 = vshll.u32 %v866, 16
      %v878 = vor.u32 %v875, %v876
      %v880 = vsel %vm359, 0, %v878
      %v881 = vsel %vm378, %v880, 0
      %v882 = vrot.slane %v876, 1
      %v883 = vor.u32 %v873, %v882
      %v885 = vsel %vm385, %v883, 0
      %v886 = vsel %vm404, %v885, 0
      %v887 = vrot.slane %v866, 1
      %v889 = vsel %vm407, %v887, 0
      %v891 = vsel %vm428, %v889, 0
      %893 = vrot.lane.b32.xlu0 %v881, 8
      %v894 = vpop.permute.xlu0 %893
      %895 = vrot.lane.b32.xlu0 %v866, 16
      %v896 = vpop.permute.xlu0 %895
      %898 = vrot.lane.b32.xlu0 %v886, 24
      %v899 = vpop.permute.xlu0 %898
      %901 = vrot.lane.b32.xlu0 %v891, 32
      %v902 = vpop.permute.xlu0 %901
      %vm903 = vcmask 64512
      %v906 = vsel %vm903, %v871, %v894
      %v908 = vsel %vm782, %v906, %v896
      %vm909 = vcmask 195584
      %v911 = vsel %vm909, %v908, %v899
      %v913 = vsel %vm438, %v911, %v902
      %v914 = vld [vmem:[%s4] sm:$0xf]
      %v915 = vld [vmem:[%s4 + $0x4] sm:$0xf]
      %v916 = vld [vmem:[%s4 + $0x8] sm:$0xf]
      %v917 = vld [vmem:[%s4 + $0xc] sm:$0xf]
      %v918 = vld [vmem:[%s4 + $0x10] sm:$0xf]
      %v919 = vld [vmem:[%s6 + $0x3] sm:$0x1]
      %v921 = vperm.slane %v919, 0
      %v928 = vunpack.c.l.b16 %v914
      %v929 = vunpack.c.l.b16 %v915
      %v930 = vunpack.c.l.b16 %v916
      %v931 = vunpack.c.l.b16 %v917
      %v932 = vunpack.c.l.b16 %v918
      %v933 = vpack.c.b16 %v929, %v928
      %v934 = vpack.c.b16 %v931, %v930
      %v935 = vpack.c.b16 %v932, %v932
      %vm938 = vcmask 326656
      %v939 = vsel %vm938, %v913, 0
      %vm941 = vcmask 1043456
      %v943 = vsel %vm941, %v935, 0
      %945 = vmatpush.bf16.msra.mxu0 0
      %946 = vmatpush.bf16.msra.mxu0 0
      %947 = vmatpush.bf16.msra.mxu0 0
      %948 = vmatpush.bf16.msra.mxu0 0
      %949 = vmatpush.bf16.msra.mxu0 0
      %950 = vmatpush.bf16.msra.mxu0 %v943
      %951 = vmatpush.bf16.msra.mxu0 %v934
      %952 = vmatpush.bf16.msra.mxu0 %v933
      %953 = vmatmul.bf16.gmra.mxu0 %v939
      %v954 = vpop.f32.mrf.mxu0
      %v955 = vadd.f32 %v921, %v954
      %v956 = vpop.f32.mrf.mxu0
      %v957 = vadd.f32 %v921, %v956
      %958 = vdwg.mxu0
      %vm959 = vcmp.ge.f32.partialorder %v955, 0.0
      %vm960 = vcmp.ge.f32.partialorder %v957, 0.0
      %v961 = vmul.f32 %v955, 0.01
      %v962 = vmul.f32 %v957, 0.01
      %v963 = vsel %vm959, %v955, %v961
      %v964 = vsel %vm960, %v957, %v962
      %v965 = vpack.c.bf16 %v964, %v963
      %v966 = vld [vmem:[%s5] sm:$0x3]
      %v967 = vld [vmem:[%s6 + $0x4] sm:$0x1]
      %v969 = vperm.slane %v967, 0
      %vm971 = vcmask 31744
      %v973 = vsel %vm971, %v965, 0
      %vm975 = vcmask 1041408
      %v977 = vsel %vm975, %v966, 0
      %979 = vmatpush.bf16.msra.mxu0 0
      %980 = vmatpush.bf16.msra.mxu0 0
      %981 = vmatpush.bf16.msra.mxu0 0
      %982 = vmatpush.bf16.msra.mxu0 0
      %983 = vmatpush.bf16.msra.mxu0 0
      %984 = vmatpush.bf16.msra.mxu0 0
      %985 = vmatpush.bf16.msra.mxu0 0
      %986 = vmatpush.bf16.msra.mxu0 %v977
      %987 = vmatmul.bf16.gmra.mxu0 %v973
      %v988 = vpop.f32.mrf.mxu0
      %v989 = vadd.f32 %v969, %v988
      %v990 = vpop.f32.mrf.mxu0
      %v991 = vadd.f32 %v969, %v990
      %992 = vdwg.mxu0
      %vm993 = vcmask 15360
      %994 = vst.msk [vmem:[%s278] sm:$0xff] %vm993, %v989
      %995 = vst.msk [vmem:[%s278 + $0x8] sm:$0xff] %vm993, %v991
      %p996 = scmp.lt.s32.totalorder %s18, 1
      %s997 = scalar_select %p996, %s18, 1
      %s998 = smul.addr %s997, 2
      %s999 = smul.addr %s998, 8
      %s1000 = scalar_lea.vmem %s7, %s999
      // Predicated region
      $region49: #{tpu_custom_call.1} parent=47 // pred_check
        %p1001 = pneg %p188
      $region50: #{tpu_custom_call.1} parent=47 // pred_check_branch
        %1003 = sbr.rel (%p1001) target = $region52
      $region51: #{tpu_custom_call.1} parent=47 // pred_region
        _
      $region52: #{tpu_custom_call.1} parent=47 // pred_fallthru
        _
    $region48: #{tpu_custom_call.1} parent=5 // pred_fallthru
      _
    %p1004 = scmp.le.s32.totalorder 2, %s13
    // Predicated region
    $region53: #{tpu_custom_call.1} parent=5 // pred_check
      %p1005 = pneg %p1004
    $region54: #{tpu_custom_call.1} parent=5 // pred_check_branch
      %1007 = sbr.rel (%p1005) target = $region56
    $region55: #{tpu_custom_call.1} parent=5 // pred_region
      %s1008 = ssub.s32 %s13, 2
      // Predicated region
      $region57: #{tpu_custom_call.1} parent=55 // pred_check
        %p1009 = pneg %p194
      $region58: #{tpu_custom_call.1} parent=55 // pred_check_branch
        %1011 = sbr.rel (%p1009) target = $region60
      $region59: #{tpu_custom_call.1} parent=55 // pred_region
        %p1012 = scmp.lt.s32.totalorder %s19, 1
        %s1013 = scalar_select %p1012, %s19, 1
        %s1014 = smul.addr %s1013, 2
        %s1015 = smul.addr %s1014, 8
        %s1016 = scalar_lea.vmem %s7, %s1015
      $region60: #{tpu_custom_call.1} parent=55 // pred_fallthru
        _
    $region56: #{tpu_custom_call.1} parent=5 // pred_fallthru
      _
  $region6: #{tpu_custom_call.1} parent=0 // loop_footer
    %s17 = sadd.s32 1, %s13
  $region7: #{tpu_custom_call.1} parent=0 // loop_footer_branch
    %12 = sbr.rel target = $region3
  $region8: #{tpu_custom_call.1} parent=0 // loop_exit
    _

</llo_original>
